<compile_context>
chip_gen: v5e
topology: v5e:2x2
jax: 0.10.0
libtpu: 0.0.40
codegen_flags: <defaults>
</compile_context>

<pallas_src>
import functools

import jax
import jax.numpy as jnp
from jax.experimental import pallas as pl
from jax.experimental.pallas import tpu as pltpu

# ----------------------------- config -----------------------------------
KSIZE = 3
STRIDE = 1
BN_EPS = 1e-5
# TODO(synk): exact ActQuant definition from teeNet1 is unavailable; we use a
#             standard clipped uniform fake-quant (clip=6.0, 4 bits).
ACT_CLIP = 6.0
ACT_BITS = 4

LANE = 128
SUBLANE = 8


def _round_up(x, m):
    return (x + m - 1) // m * m


# ----------------------------- kernel ------------------------------------
def _vgg_block2_kernel(x_ref, w_ref, b_ref, o_ref, acc_ref, *,
                       trw, w_img, win_rows, pack_kw, clip, levels):
    """Grid step = (image n, output-row tile t).

    x_ref  : (R_pad, Cin)          VMEM-resident row-flattened image (input dtype)
    w_ref  : (3, 3*Cin, Cout_pad)  bf16 packed  OR  (9, Cin, Cout_pad) unpacked
    b_ref  : (1, Cout_pad)         f32 folded conv-bias + BN shift
    o_ref  : (trw, Cout_pad)       out dtype, flat output rows [t*trw, (t+1)*trw)
    acc_ref: (trw, Cout_pad)       f32 accumulator scratch (counted in VMEM budget)
    """
    t = pl.program_id(1)
    row_base = pl.multiple_of(t * trw, SUBLANE)   # trw % 8 == 0 -> aligned start
    # One aligned dynamic load per tile covers all nine taps (static halo of
    # 2 image rows + 2); every tap view below is a static slice of this value.
    xwin = x_ref[pl.ds(row_base, win_rows), :]

    acc_ref[...] = jnp.zeros_like(acc_ref)
    if pack_kw:
        # K-packed path: 3 matmuls with K = 3*Cin (kw taps concatenated on K).
        for kh in range(KSIZE):
            base = kh * w_img
            lhs = jnp.concatenate(
                [xwin[base + kw: base + kw + trw, :] for kw in range(KSIZE)],
                axis=-1).astype(jnp.bfloat16)
            acc_ref[...] += jnp.dot(lhs, w_ref[kh],
                                    preferred_element_type=jnp.float32)
    else:
        # Fallback: 9 shift-and-accumulate matmuls with K = Cin.
        for kh in range(KSIZE):
            for kw in range(KSIZE):
                off = kh * w_img + kw
                lhs = xwin[off: off + trw, :].astype(jnp.bfloat16)
                acc_ref[...] += jnp.dot(lhs, w_ref[kh * KSIZE + kw],
                                        preferred_element_type=jnp.float32)

    # Epilogue in place: folded bias + ReLU + clipped uniform fake-quant.
    y = acc_ref[...] + b_ref[...]
    y = jnp.minimum(jnp.maximum(y, 0.0), clip)
    y = jnp.round(y * (levels / clip)) * (clip / levels)
    o_ref[...] = y.astype(o_ref.dtype)


# ----------------------------- wrappers -----------------------------------
def _vmem_limit_bytes(need):
    try:
        cap = int(pltpu.get_tpu_info().vmem_capacity_bytes)
    except Exception:            # conservative fallback: smallest per-TC VMEM (v7x)
        cap = 64 << 20
    cap = max(cap - (16 << 20), 32 << 20)   # headroom for Mosaic scratch / sems
    return int(min(max(need, 32 << 20), cap))


def vgg_block2_forward_nhwc(x_nhwc, conv_w, conv_b, bn_gamma, bn_beta,
                            bn_mean, bn_var, *, row_block=512,
                            out_dtype=jnp.bfloat16, return_padded=False):
    """Channels-last core. x_nhwc: (N, H, W, Cin) -> (N, OH, OW, Cout).

    Production networks should call this NHWC entry point directly (ideally
    consuming the padded flat layout via return_padded=True) so the NCHW
    transposes and the final slice never become extra HBM passes.
    """
    N, H, W, Cin = x_nhwc.shape
    Cout = conv_w.shape[0]
    OH = (H - KSIZE) // STRIDE + 1
    OW = (W - KSIZE) // STRIDE + 1
    Cout_pad = _round_up(Cout, LANE)              # lane-dense output stores

    # --- row tiling --------------------------------------------------------
    ohw = OH * W                                  # flat output rows per image
    trw = _round_up(min(row_block, ohw), SUBLANE)  # output rows per grid step
    T = pl.cdiv(ohw, trw)                         # row tiles per image
    op = T * trw                                  # padded output rows
    win_rows = trw + (KSIZE - 1) * W + SUBLANE    # per-tile input window (halo)
    r_pad = _round_up((T - 1) * trw + win_rows, SUBLANE)

    # --- operands (no bf16 cast here: the kernel casts on the VPU) ----------
    x_flat = x_nhwc.reshape(N, H * W, Cin)
    x_flat = jnp.pad(x_flat, ((0, 0), (0, r_pad - H * W), (0, 0)))
    # TODO(synk): the halo/row pad copy could be removed by letting the last
    #             (garbage-only) rows come from a masked partial block read.

    # Fold eval-mode BatchNorm: scale into weights, shift into bias.
    inv_std = 1.0 / jnp.sqrt(bn_var + BN_EPS)
    scale = bn_gamma * inv_std                                         # (Cout,)
    wt = jnp.transpose(conv_w, (2, 3, 1, 0)) * scale[None, None, None, :]  # (3,3,Cin,Cout)
    bias = (bn_beta + (conv_b - bn_mean) * scale).reshape(1, Cout)

    pack_kw = (Cin % LANE == 0)   # lane-aligned concat along K is free
    if pack_kw:
        w_k = wt.reshape(KSIZE, KSIZE * Cin, Cout)        # tap = kh, K = kw*Cin + c
    else:
        w_k = wt.reshape(KSIZE * KSIZE, Cin, Cout)        # tap = kh*3 + kw
    ntap, kdim = w_k.shape[0], w_k.shape[1]
    w_k = jnp.pad(w_k, ((0, 0), (0, 0), (0, Cout_pad - Cout))).astype(jnp.bfloat16)
    bias = jnp.pad(bias, ((0, 0), (0, Cout_pad - Cout))).astype(jnp.float32)

    # --- VMEM budget: double-buffered blocks + declared scratch + window ----
    x_b = x_flat.dtype.itemsize
    o_b = jnp.dtype(out_dtype).itemsize
    need = (2 * r_pad * Cin * x_b                 # resident input block
            + 2 * ntap * kdim * Cout_pad * 2      # weights (bf16)
            + 2 * Cout_pad * 4                    # bias
            + 2 * trw * Cout_pad * o_b            # output block
            + trw * Cout_pad * 4                  # f32 accumulator scratch
            + 2 * win_rows * Cin * (x_b + 2)      # in-kernel tap window + bf16 cast
            + (4 << 20))                          # Mosaic internal scratch headroom

    cost = pl.CostEstimate(
        flops=2 * N * OH * OW * KSIZE * KSIZE * Cin * Cout,
        transcendentals=0,
        bytes_accessed=int(x_flat.size * x_b + w_k.size * 2 + bias.size * 4
                           + N * op * Cout_pad * o_b))

    kernel = functools.partial(
        _vgg_block2_kernel, trw=trw, w_img=W, win_rows=win_rows,
        pack_kw=pack_kw, clip=ACT_CLIP, levels=float(2 ** ACT_BITS - 1))

    out_flat = pl.pallas_call(
        kernel,
        out_shape=jax.ShapeDtypeStruct((N, op, Cout_pad), out_dtype),
        grid_spec=pltpu.PrefetchScalarGridSpec(
            num_scalar_prefetch=0,
            grid=(N, T),
            in_specs=[
                pl.BlockSpec((None, r_pad, Cin), lambda n, t: (n, 0, 0)),
                pl.BlockSpec((ntap, kdim, Cout_pad), lambda n, t: (0, 0, 0)),
                pl.BlockSpec((1, Cout_pad), lambda n, t: (0, 0)),
            ],
            out_specs=pl.BlockSpec((None, trw, Cout_pad), lambda n, t: (n, t, 0)),
            scratch_shapes=[pltpu.VMEM((trw, Cout_pad), jnp.float32)],
        ),
        compiler_params=pltpu.CompilerParams(
            dimension_semantics=("parallel", "parallel"),
            vmem_limit_bytes=_vmem_limit_bytes(need),
        ),
        cost_estimate=cost,
    )(x_flat, w_k, bias)

    if return_padded:
        # (N, T*trw, Cout_pad): rows >= OH*W, columns w >= OW and channels
        # >= Cout are garbage / zero padding -- the consumer must mask them.
        return out_flat
    return out_flat[:, :ohw, :Cout].reshape(N, OH, W, Cout)[:, :, :OW, :]


@functools.partial(jax.jit, static_argnames=("row_block",))
def vgg_block2_forward(x_nchw, conv_w, conv_b, bn_gamma, bn_beta, bn_mean,
                       bn_var, *, row_block=512):
    """NCHW-compatible wrapper matching the PyTorch module interface."""
    x_nhwc = jnp.transpose(x_nchw, (0, 2, 3, 1))
    out = vgg_block2_forward_nhwc(x_nhwc, conv_w, conv_b, bn_gamma, bn_beta,
                                  bn_mean, bn_var, row_block=row_block)
    return jnp.transpose(out, (0, 3, 1, 2))


# ----------------------------- reference (pure JAX, f32) -------------------
def _reference(x_nchw, conv_w, conv_b, bn_gamma, bn_beta, bn_mean, bn_var):
    y = jax.lax.conv_general_dilated(
        x_nchw, conv_w, window_strides=(STRIDE, STRIDE), padding="VALID",
        dimension_numbers=("NCHW", "OIHW", "NCHW"))
    y = y + conv_b[None, :, None, None]
    inv_std = 1.0 / jnp.sqrt(bn_var + BN_EPS)
    y = (y - bn_mean[None, :, None, None]) * (bn_gamma * inv_std)[None, :, None, None]
    y = y + bn_beta[None, :, None, None]
    y = jnp.maximum(y, 0.0)
    levels = float(2 ** ACT_BITS - 1)
    y = jnp.minimum(y, ACT_CLIP)
    return jnp.round(y * (levels / ACT_CLIP)) * (ACT_CLIP / levels)


# ----------------------------- main ---------------------------------------
if __name__ == "__main__":
    def make_case(key, n, cin, cout, h, w, w_scale):
        ks = jax.random.split(key, 7)
        x = jax.random.normal(ks[0], (n, cin, h, w), dtype=jnp.float32)
        cw = w_scale * jax.random.normal(ks[1], (cout, cin, KSIZE, KSIZE), jnp.float32)
        cb = 0.05 * jax.random.normal(ks[2], (cout,), jnp.float32)
        g = 1.0 + 0.1 * jax.random.normal(ks[3], (cout,), jnp.float32)
        be = 0.1 * jax.random.normal(ks[4], (cout,), jnp.float32)
        mu = 0.1 * jax.random.normal(ks[5], (cout,), jnp.float32)
        var = jnp.abs(0.5 + 0.1 * jax.random.normal(ks[6], (cout,), jnp.float32))
        return x, cw, cb, g, be, mu, var

    key = jax.random.PRNGKey(0)
    k1, k2 = jax.random.split(key)

    quant_step = ACT_CLIP / float(2 ** ACT_BITS - 1)
    # Tolerance: one quant level (bf16 MXU inputs can flip a rounding boundary)
    # plus bf16 output-store rounding (<= 6 * 2^-8).
    tol = quant_step + 0.05

    # --- Test 1: module-consistent small shapes (N=2, Cin=4, 16x16, Cout=16).
    # Exercises the 9-tap fallback (Cin not lane aligned), the multi-row-tile
    # path (row_block=128 -> 2 tiles/image) and the Cout<128 lane padding.
    x, cw, cb, g, be, mu, var = make_case(k1, n=2, cin=4, cout=16, h=16, w=16, w_scale=0.1)
    out = jax.block_until_ready(
        vgg_block2_forward(x, cw, cb, g, be, mu, var, row_block=128))
    assert out.shape == (2, 16, 14, 14), out.shape
    assert out.dtype == jnp.bfloat16, out.dtype
    ref = _reference(x, cw, cb, g, be, mu, var)
    max_diff = float(jnp.max(jnp.abs(out.astype(jnp.float32) - ref)))
    assert max_diff <= tol, max_diff

    # --- Test 2: lane-aligned channels (N=1, Cin=128, 16x16, Cout=128).
    # Exercises the packed-K path (3 matmuls with K = 3*128 = 384) and the
    # lane-dense Cout=128 output.
    x, cw, cb, g, be, mu, var = make_case(k2, n=1, cin=128, cout=128, h=16, w=16, w_scale=0.03)
    out = jax.block_until_ready(
        vgg_block2_forward(x, cw, cb, g, be, mu, var, row_block=128))
    assert out.shape == (1, 128, 14, 14), out.shape
    ref = _reference(x, cw, cb, g, be, mu, var)
    max_diff = float(jnp.max(jnp.abs(out.astype(jnp.float32) - ref)))
    assert max_diff <= tol, max_diff

    print("KERNEL_OK")
</pallas_src>

<mosaic_0001>
module attributes {stable_mosaic.version = 11 : i64} {
  func.func @_vgg_block2_kernel(%arg0: i32, %arg1: i32, %arg2: memref<1x296x4xf32, #tpu.memory_space<vmem>>, %arg3: memref<9x4x128xbf16, #tpu.memory_space<vmem>>, %arg4: memref<1x128xf32, #tpu.memory_space<vmem>>, %arg5: memref<1x128x128xbf16, #tpu.memory_space<vmem>>, %arg6: memref<128x128xf32, #tpu.memory_space<vmem>>) attributes {dimension_semantics = [#tpu.dimension_semantics<parallel>, #tpu.dimension_semantics<parallel>], iteration_bounds = array<i64: 2, 2>, scalar_prefetch = 0 : i64, scratch_operands = 1 : i64, tpu.core_type = #tpu.core_type<tc>, window_params = [{transform_indices = @transform_0, window_bounds = array<i64: 1, 296, 4>}, {pipeline_mode = #tpu.pipeline_mode<synchronous>, transform_indices = @transform_1, window_bounds = array<i64: 9, 4, 128>}, {pipeline_mode = #tpu.pipeline_mode<synchronous>, transform_indices = @transform_2, window_bounds = array<i64: 1, 128>}, {transform_indices = @transform_3, window_bounds = array<i64: 1, 128, 128>}]} {
    %c128_i32 = arith.constant 128 : i32
    %0 = arith.muli %arg1, %c128_i32 : i32
    %1 = tpu.assume_multiple %0, 8 : i32
    %c0 = arith.constant 0 : index
    %2 = arith.index_cast %1 : i32 to index
    %c0_0 = arith.constant 0 : index
    %3 = vector.load %arg2[%c0, %2, %c0_0] : memref<1x296x4xf32, #tpu.memory_space<vmem>>, vector<1x168x4xf32>
    %4 = vector.shape_cast %3 : vector<1x168x4xf32> to vector<168x4xf32>
    %cst = arith.constant 0.000000e+00 : f32
    %5 = vector.broadcast %cst : f32 to vector<128x128xf32>
    %c0_1 = arith.constant 0 : index
    %c0_2 = arith.constant 0 : index
    %6 = vector.load %arg6[%c0_1, %c0_2] : memref<128x128xf32, #tpu.memory_space<vmem>>, vector<128x128xf32>
    tpu.vector_store %arg6[%c0_1, %c0_2], %5 {strides = array<i32>} : memref<128x128xf32, #tpu.memory_space<vmem>>, vector<128x128xf32>,
    %7 = vector.extract_strided_slice %4 {offsets = [0, 0], sizes = [128, 4], strides = [1, 1]} : vector<168x4xf32> to vector<128x4xf32>
    %8 = arith.truncf %7 : vector<128x4xf32> to vector<128x4xbf16>
    %c0_3 = arith.constant 0 : index
    %c0_4 = arith.constant 0 : index
    %9 = vector.load %arg6[%c0_3, %c0_4] : memref<128x128xf32, #tpu.memory_space<vmem>>, vector<128x128xf32>
    %c0_5 = arith.constant 0 : index
    %c0_6 = arith.constant 0 : index
    %c0_7 = arith.constant 0 : index
    %10 = vector.load %arg3[%c0_5, %c0_6, %c0_7] : memref<9x4x128xbf16, #tpu.memory_space<vmem>>, vector<1x4x128xbf16>
    %11 = vector.shape_cast %10 : vector<1x4x128xbf16> to vector<4x128xbf16>
    %cst_8 = arith.constant dense<0.000000e+00> : vector<128x128xf32>
    %12 = tpu.matmul %8, %11, %cst_8 {dimension_numbers = #tpu.dot_dimension_numbers<[1], [0], [0], [1], [0, 0, 1, 1], [], []>} : vector<128x4xbf16>, vector<4x128xbf16>, vector<128x128xf32> -> vector<128x128xf32>
    %13 = arith.addf %9, %12 : vector<128x128xf32>
    %c0_9 = arith.constant 0 : index
    %c0_10 = arith.constant 0 : index
    %14 = vector.load %arg6[%c0_9, %c0_10] : memref<128x128xf32, #tpu.memory_space<vmem>>, vector<128x128xf32>
    tpu.vector_store %arg6[%c0_9, %c0_10], %13 {strides = array<i32>} : memref<128x128xf32, #tpu.memory_space<vmem>>, vector<128x128xf32>,
    %15 = vector.extract_strided_slice %4 {offsets = [1, 0], sizes = [128, 4], strides = [1, 1]} : vector<168x4xf32> to vector<128x4xf32>
    %16 = arith.truncf %15 : vector<128x4xf32> to vector<128x4xbf16>
    %c0_11 = arith.constant 0 : index
    %c0_12 = arith.constant 0 : index
    %17 = vector.load %arg6[%c0_11, %c0_12] : memref<128x128xf32, #tpu.memory_space<vmem>>, vector<128x128xf32>
    %c1 = arith.constant 1 : index
    %c0_13 = arith.constant 0 : index
    %c0_14 = arith.constant 0 : index
    %18 = vector.load %arg3[%c1, %c0_13, %c0_14] : memref<9x4x128xbf16, #tpu.memory_space<vmem>>, vector<1x4x128xbf16>
    %19 = vector.shape_cast %18 : vector<1x4x128xbf16> to vector<4x128xbf16>
    %cst_15 = arith.constant dense<0.000000e+00> : vector<128x128xf32>
    %20 = tpu.matmul %16, %19, %cst_15 {dimension_numbers = #tpu.dot_dimension_numbers<[1], [0], [0], [1], [0, 0, 1, 1], [], []>} : vector<128x4xbf16>, vector<4x128xbf16>, vector<128x128xf32> -> vector<128x128xf32>
    %21 = arith.addf %17, %20 : vector<128x128xf32>
    %c0_16 = arith.constant 0 : index
    %c0_17 = arith.constant 0 : index
    %22 = vector.load %arg6[%c0_16, %c0_17] : memref<128x128xf32, #tpu.memory_space<vmem>>, vector<128x128xf32>
    tpu.vector_store %arg6[%c0_16, %c0_17], %21 {strides = array<i32>} : memref<128x128xf32, #tpu.memory_space<vmem>>, vector<128x128xf32>,
    %23 = vector.extract_strided_slice %4 {offsets = [2, 0], sizes = [128, 4], strides = [1, 1]} : vector<168x4xf32> to vector<128x4xf32>
    %24 = arith.truncf %23 : vector<128x4xf32> to vector<128x4xbf16>
    %c0_18 = arith.constant 0 : index
    %c0_19 = arith.constant 0 : index
    %25 = vector.load %arg6[%c0_18, %c0_19] : memref<128x128xf32, #tpu.memory_space<vmem>>, vector<128x128xf32>
    %c2 = arith.constant 2 : index
    %c0_20 = arith.constant 0 : index
    %c0_21 = arith.constant 0 : index
    %26 = vector.load %arg3[%c2, %c0_20, %c0_21] : memref<9x4x128xbf16, #tpu.memory_space<vmem>>, vector<1x4x128xbf16>
    %27 = vector.shape_cast %26 : vector<1x4x128xbf16> to vector<4x128xbf16>
    %cst_22 = arith.constant dense<0.000000e+00> : vector<128x128xf32>
    %28 = tpu.matmul %24, %27, %cst_22 {dimension_numbers = #tpu.dot_dimension_numbers<[1], [0], [0], [1], [0, 0, 1, 1], [], []>} : vector<128x4xbf16>, vector<4x128xbf16>, vector<128x128xf32> -> vector<128x128xf32>
    %29 = arith.addf %25, %28 : vector<128x128xf32>
    %c0_23 = arith.constant 0 : index
    %c0_24 = arith.constant 0 : index
    %30 = vector.load %arg6[%c0_23, %c0_24] : memref<128x128xf32, #tpu.memory_space<vmem>>, vector<128x128xf32>
    tpu.vector_store %arg6[%c0_23, %c0_24], %29 {strides = array<i32>} : memref<128x128xf32, #tpu.memory_space<vmem>>, vector<128x128xf32>,
    %31 = vector.extract_strided_slice %4 {offsets = [16, 0], sizes = [128, 4], strides = [1, 1]} : vector<168x4xf32> to vector<128x4xf32>
    %32 = arith.truncf %31 : vector<128x4xf32> to vector<128x4xbf16>
    %c0_25 = arith.constant 0 : index
    %c0_26 = arith.constant 0 : index
    %33 = vector.load %arg6[%c0_25, %c0_26] : memref<128x128xf32, #tpu.memory_space<vmem>>, vector<128x128xf32>
    %c3 = arith.constant 3 : index
    %c0_27 = arith.constant 0 : index
    %c0_28 = arith.constant 0 : index
    %34 = vector.load %arg3[%c3, %c0_27, %c0_28] : memref<9x4x128xbf16, #tpu.memory_space<vmem>>, vector<1x4x128xbf16>
    %35 = vector.shape_cast %34 : vector<1x4x128xbf16> to vector<4x128xbf16>
    %cst_29 = arith.constant dense<0.000000e+00> : vector<128x128xf32>
    %36 = tpu.matmul %32, %35, %cst_29 {dimension_numbers = #tpu.dot_dimension_numbers<[1], [0], [0], [1], [0, 0, 1, 1], [], []>} : vector<128x4xbf16>, vector<4x128xbf16>, vector<128x128xf32> -> vector<128x128xf32>
    %37 = arith.addf %33, %36 : vector<128x128xf32>
    %c0_30 = arith.constant 0 : index
    %c0_31 = arith.constant 0 : index
    %38 = vector.load %arg6[%c0_30, %c0_31] : memref<128x128xf32, #tpu.memory_space<vmem>>, vector<128x128xf32>
    tpu.vector_store %arg6[%c0_30, %c0_31], %37 {strides = array<i32>} : memref<128x128xf32, #tpu.memory_space<vmem>>, vector<128x128xf32>,
    %39 = vector.extract_strided_slice %4 {offsets = [17, 0], sizes = [128, 4], strides = [1, 1]} : vector<168x4xf32> to vector<128x4xf32>
    %40 = arith.truncf %39 : vector<128x4xf32> to vector<128x4xbf16>
    %c0_32 = arith.constant 0 : index
    %c0_33 = arith.constant 0 : index
    %41 = vector.load %arg6[%c0_32, %c0_33] : memref<128x128xf32, #tpu.memory_space<vmem>>, vector<128x128xf32>
    %c4 = arith.constant 4 : index
    %c0_34 = arith.constant 0 : index
    %c0_35 = arith.constant 0 : index
    %42 = vector.load %arg3[%c4, %c0_34, %c0_35] : memref<9x4x128xbf16, #tpu.memory_space<vmem>>, vector<1x4x128xbf16>
    %43 = vector.shape_cast %42 : vector<1x4x128xbf16> to vector<4x128xbf16>
    %cst_36 = arith.constant dense<0.000000e+00> : vector<128x128xf32>
    %44 = tpu.matmul %40, %43, %cst_36 {dimension_numbers = #tpu.dot_dimension_numbers<[1], [0], [0], [1], [0, 0, 1, 1], [], []>} : vector<128x4xbf16>, vector<4x128xbf16>, vector<128x128xf32> -> vector<128x128xf32>
    %45 = arith.addf %41, %44 : vector<128x128xf32>
    %c0_37 = arith.constant 0 : index
    %c0_38 = arith.constant 0 : index
    %46 = vector.load %arg6[%c0_37, %c0_38] : memref<128x128xf32, #tpu.memory_space<vmem>>, vector<128x128xf32>
    tpu.vector_store %arg6[%c0_37, %c0_38], %45 {strides = array<i32>} : memref<128x128xf32, #tpu.memory_space<vmem>>, vector<128x128xf32>,
    %47 = vector.extract_strided_slice %4 {offsets = [18, 0], sizes = [128, 4], strides = [1, 1]} : vector<168x4xf32> to vector<128x4xf32>
    %48 = arith.truncf %47 : vector<128x4xf32> to vector<128x4xbf16>
    %c0_39 = arith.constant 0 : index
    %c0_40 = arith.constant 0 : index
    %49 = vector.load %arg6[%c0_39, %c0_40] : memref<128x128xf32, #tpu.memory_space<vmem>>, vector<128x128xf32>
    %c5 = arith.constant 5 : index
    %c0_41 = arith.constant 0 : index
    %c0_42 = arith.constant 0 : index
    %50 = vector.load %arg3[%c5, %c0_41, %c0_42] : memref<9x4x128xbf16, #tpu.memory_space<vmem>>, vector<1x4x128xbf16>
    %51 = vector.shape_cast %50 : vector<1x4x128xbf16> to vector<4x128xbf16>
    %cst_43 = arith.constant dense<0.000000e+00> : vector<128x128xf32>
    %52 = tpu.matmul %48, %51, %cst_43 {dimension_numbers = #tpu.dot_dimension_numbers<[1], [0], [0], [1], [0, 0, 1, 1], [], []>} : vector<128x4xbf16>, vector<4x128xbf16>, vector<128x128xf32> -> vector<128x128xf32>
    %53 = arith.addf %49, %52 : vector<128x128xf32>
    %c0_44 = arith.constant 0 : index
    %c0_45 = arith.constant 0 : index
    %54 = vector.load %arg6[%c0_44, %c0_45] : memref<128x128xf32, #tpu.memory_space<vmem>>, vector<128x128xf32>
    tpu.vector_store %arg6[%c0_44, %c0_45], %53 {strides = array<i32>} : memref<128x128xf32, #tpu.memory_space<vmem>>, vector<128x128xf32>,
    %55 = vector.extract_strided_slice %4 {offsets = [32, 0], sizes = [128, 4], strides = [1, 1]} : vector<168x4xf32> to vector<128x4xf32>
    %56 = arith.truncf %55 : vector<128x4xf32> to vector<128x4xbf16>
    %c0_46 = arith.constant 0 : index
    %c0_47 = arith.constant 0 : index
    %57 = vector.load %arg6[%c0_46, %c0_47] : memref<128x128xf32, #tpu.memory_space<vmem>>, vector<128x128xf32>
    %c6 = arith.constant 6 : index
    %c0_48 = arith.constant 0 : index
    %c0_49 = arith.constant 0 : index
    %58 = vector.load %arg3[%c6, %c0_48, %c0_49] : memref<9x4x128xbf16, #tpu.memory_space<vmem>>, vector<1x4x128xbf16>
    %59 = vector.shape_cast %58 : vector<1x4x128xbf16> to vector<4x128xbf16>
    %cst_50 = arith.constant dense<0.000000e+00> : vector<128x128xf32>
    %60 = tpu.matmul %56, %59, %cst_50 {dimension_numbers = #tpu.dot_dimension_numbers<[1], [0], [0], [1], [0, 0, 1, 1], [], []>} : vector<128x4xbf16>, vector<4x128xbf16>, vector<128x128xf32> -> vector<128x128xf32>
    %61 = arith.addf %57, %60 : vector<128x128xf32>
    %c0_51 = arith.constant 0 : index
    %c0_52 = arith.constant 0 : index
    %62 = vector.load %arg6[%c0_51, %c0_52] : memref<128x128xf32, #tpu.memory_space<vmem>>, vector<128x128xf32>
    tpu.vector_store %arg6[%c0_51, %c0_52], %61 {strides = array<i32>} : memref<128x128xf32, #tpu.memory_space<vmem>>, vector<128x128xf32>,
    %63 = vector.extract_strided_slice %4 {offsets = [33, 0], sizes = [128, 4], strides = [1, 1]} : vector<168x4xf32> to vector<128x4xf32>
    %64 = arith.truncf %63 : vector<128x4xf32> to vector<128x4xbf16>
    %c0_53 = arith.constant 0 : index
    %c0_54 = arith.constant 0 : index
    %65 = vector.load %arg6[%c0_53, %c0_54] : memref<128x128xf32, #tpu.memory_space<vmem>>, vector<128x128xf32>
    %c7 = arith.constant 7 : index
    %c0_55 = arith.constant 0 : index
    %c0_56 = arith.constant 0 : index
    %66 = vector.load %arg3[%c7, %c0_55, %c0_56] : memref<9x4x128xbf16, #tpu.memory_space<vmem>>, vector<1x4x128xbf16>
    %67 = vector.shape_cast %66 : vector<1x4x128xbf16> to vector<4x128xbf16>
    %cst_57 = arith.constant dense<0.000000e+00> : vector<128x128xf32>
    %68 = tpu.matmul %64, %67, %cst_57 {dimension_numbers = #tpu.dot_dimension_numbers<[1], [0], [0], [1], [0, 0, 1, 1], [], []>} : vector<128x4xbf16>, vector<4x128xbf16>, vector<128x128xf32> -> vector<128x128xf32>
    %69 = arith.addf %65, %68 : vector<128x128xf32>
    %c0_58 = arith.constant 0 : index
    %c0_59 = arith.constant 0 : index
    %70 = vector.load %arg6[%c0_58, %c0_59] : memref<128x128xf32, #tpu.memory_space<vmem>>, vector<128x128xf32>
    tpu.vector_store %arg6[%c0_58, %c0_59], %69 {strides = array<i32>} : memref<128x128xf32, #tpu.memory_space<vmem>>, vector<128x128xf32>,
    %71 = vector.extract_strided_slice %4 {offsets = [34, 0], sizes = [128, 4], strides = [1, 1]} : vector<168x4xf32> to vector<128x4xf32>
    %72 = arith.truncf %71 : vector<128x4xf32> to vector<128x4xbf16>
    %c0_60 = arith.constant 0 : index
    %c0_61 = arith.constant 0 : index
    %73 = vector.load %arg6[%c0_60, %c0_61] : memref<128x128xf32, #tpu.memory_space<vmem>>, vector<128x128xf32>
    %c8 = arith.constant 8 : index
    %c0_62 = arith.constant 0 : index
    %c0_63 = arith.constant 0 : index
    %74 = vector.load %arg3[%c8, %c0_62, %c0_63] : memref<9x4x128xbf16, #tpu.memory_space<vmem>>, vector<1x4x128xbf16>
    %75 = vector.shape_cast %74 : vector<1x4x128xbf16> to vector<4x128xbf16>
    %cst_64 = arith.constant dense<0.000000e+00> : vector<128x128xf32>
    %76 = tpu.matmul %72, %75, %cst_64 {dimension_numbers = #tpu.dot_dimension_numbers<[1], [0], [0], [1], [0, 0, 1, 1], [], []>} : vector<128x4xbf16>, vector<4x128xbf16>, vector<128x128xf32> -> vector<128x128xf32>
    %77 = arith.addf %73, %76 : vector<128x128xf32>
    %c0_65 = arith.constant 0 : index
    %c0_66 = arith.constant 0 : index
    %78 = vector.load %arg6[%c0_65, %c0_66] : memref<128x128xf32, #tpu.memory_space<vmem>>, vector<128x128xf32>
    tpu.vector_store %arg6[%c0_65, %c0_66], %77 {strides = array<i32>} : memref<128x128xf32, #tpu.memory_space<vmem>>, vector<128x128xf32>,
    %c0_67 = arith.constant 0 : index
    %c0_68 = arith.constant 0 : index
    %79 = vector.load %arg6[%c0_67, %c0_68] : memref<128x128xf32, #tpu.memory_space<vmem>>, vector<128x128xf32>
    %c0_69 = arith.constant 0 : index
    %c0_70 = arith.constant 0 : index
    %80 = vector.load %arg4[%c0_69, %c0_70] : memref<1x128xf32, #tpu.memory_space<vmem>>, vector<1x128xf32>
    %81 = vector.broadcast %80 : vector<1x128xf32> to vector<128x128xf32>
    %82 = arith.addf %79, %81 : vector<128x128xf32>
    %cst_71 = arith.constant 0.000000e+00 : f32
    %83 = vector.broadcast %cst_71 : f32 to vector<128x128xf32>
    %84 = arith.maximumf %82, %83 : vector<128x128xf32>
    %cst_72 = arith.constant 6.000000e+00 : f32
    %85 = vector.broadcast %cst_72 : f32 to vector<128x128xf32>
    %86 = arith.minimumf %84, %85 : vector<128x128xf32>
    %cst_73 = arith.constant 2.500000e+00 : f32
    %87 = vector.broadcast %cst_73 : f32 to vector<128x128xf32>
    %88 = arith.mulf %86, %87 : vector<128x128xf32>
    %89 = math.roundeven %88 : vector<128x128xf32>
    %cst_74 = arith.constant 4.000000e-01 : f32
    %90 = vector.broadcast %cst_74 : f32 to vector<128x128xf32>
    %91 = arith.mulf %89, %90 : vector<128x128xf32>
    %92 = arith.truncf %91 : vector<128x128xf32> to vector<128x128xbf16>
    %c0_75 = arith.constant 0 : index
    %c0_76 = arith.constant 0 : index
    %c0_77 = arith.constant 0 : index
    %93 = vector.load %arg5[%c0_75, %c0_76, %c0_77] : memref<1x128x128xbf16, #tpu.memory_space<vmem>>, vector<1x128x128xbf16>
    %94 = vector.shape_cast %93 : vector<1x128x128xbf16> to vector<128x128xbf16>
    %95 = vector.shape_cast %92 : vector<128x128xbf16> to vector<1x128x128xbf16>
    tpu.vector_store %arg5[%c0_75, %c0_76, %c0_77], %95 {strides = array<i32>} : memref<1x128x128xbf16, #tpu.memory_space<vmem>>, vector<1x128x128xbf16>,
    return
  }
  func.func @transform_0(%arg0: i32, %arg1: i32) -> (i32, i32, i32) {
    %c0_i32 = arith.constant 0 : i32
    %c0_i32_0 = arith.constant 0 : i32
    %c0_i32_1 = arith.constant 0 : i32
    return %arg0, %c0_i32, %c0_i32_0 : i32, i32, i32
  }
  func.func @transform_1(%arg0: i32, %arg1: i32) -> (i32, i32, i32) {
    %c0_i32 = arith.constant 0 : i32
    %c0_i32_0 = arith.constant 0 : i32
    %c0_i32_1 = arith.constant 0 : i32
    %c0_i32_2 = arith.constant 0 : i32
    return %c0_i32, %c0_i32_0, %c0_i32_1 : i32, i32, i32
  }
  func.func @transform_2(%arg0: i32, %arg1: i32) -> (i32, i32) {
    %c0_i32 = arith.constant 0 : i32
    %c0_i32_0 = arith.constant 0 : i32
    %c0_i32_1 = arith.constant 0 : i32
    return %c0_i32, %c0_i32_0 : i32, i32
  }
  func.func @transform_3(%arg0: i32, %arg1: i32) -> (i32, i32, i32) {
    %c0_i32 = arith.constant 0 : i32
    %c0_i32_0 = arith.constant 0 : i32
    return %arg0, %arg1, %c0_i32 : i32, i32, i32
  }
}

</mosaic_0001>

<llo_original>
// kernel: vgg_block2_forward.1
$region0: #{vgg_block2_forward.1}
  #allocation0 [shape = 'u32[]', space=smem, size = 0x4, offset = 0x4, fixed_abs, tag = 'smem constant byte address 0x4 - core index']
  #allocation1 [shape = 'u32[72,128]{1,0:T(1,128)}', space=vmem, size = 0x9000, scoped, tag = 'internal scratch']
  #allocation2 [shape = 'f32[128,128]{1,0:T(8,128)}', space=vmem, size = 0x10000, scoped, tag = 'scratch operand']
  %s0 = inlined_call_operand.vmem [shape: f32[2,296,4], index: 0, kind: input, shape index: {}]
  %s1 = inlined_call_operand.vmem [shape: bf16[9,4,128], index: 1, kind: input, shape index: {}]
  %s2 = inlined_call_operand.vmem [shape: f32[1,128], index: 2, kind: input, shape index: {}]
  %s3 = inlined_call_operand.vmem [shape: bf16[2,256,128], index: 3, kind: output, shape index: {}]
  %s4 = sld [smem:[#allocation0]]
  $region45: #{vgg_block2_forward.1} parent=0
    _
  %s6 = ssub.s32 1, %s4
  %s7 = scalar_select 0, %s6, %s4
  loop: start=0, step=1, limit=6
  $region2: #{vgg_block2_forward.1} parent=0 // loop_pre_header
    _
  $region3: #{vgg_block2_forward.1} parent=0 // loop_header
    %s9 = sphi 0, %s13
    %p10 = scmp.ge.s32.totalorder %s9, 6
    %s16 = sphi 0, %s28
    %s17 = sphi 0, %s24
    %s18 = sphi 0, %s16
    %s19 = sphi 0, %s17
    %s20 = sphi 0, %s18
    %s21 = sphi 0, %s19
    %s31 = sphi 0, %s33
    %s34 = sphi 0, %s31
    %s35 = sphi 0, %s34
    %s51 = sphi 0, %s35
    %s55 = sphi 0, %s55
    %s57 = sphi 0, %s55
    %s58 = sphi 0, %s57
    %s72 = sphi 0, %s58
    %s76 = sphi 0, %s76
    %s78 = sphi 0, %s76
    %s79 = sphi 0, %s78
    %s93 = sphi 0, %s79
    %s101 = sphi 0, %s103
    %s104 = sphi 0, %s101
    %s105 = sphi 0, %s104
    %s121 = sphi 0, %s105
  $region4: #{vgg_block2_forward.1} parent=0 // loop_header_branch
    %12 = sbr.rel (%p10) target = $region8
  $region5: #{vgg_block2_forward.1} parent=0 // loop_body
    %s14 = ssub.s32 %s9, 1
    %s15 = ssub.s32 %s9, 2
    %s22 = sadd.s32 1, %s17
    %p23 = scmp.ge.s32.totalorder %s22, 2
    %s24 = scalar_select %p23, 0, %s22
    %s25 = sadd.s32 1, %s16
    %s26 = scalar_select %p23, %s25, %s16
    %p27 = scmp.ge.s32.totalorder %s26, 2
    %s28 = scalar_select %p27, 0, %s26
    %s29 = ssub.s32 %s16, %s28
    %p30 = scmp.eq.s32.totalorder %s29, 0
    %s32 = sadd.s32 %s31, 1
    %s33 = scalar_select %p30, %s31, %s32
    %p36 = pneg %p30
    %p37 = scmp.eq.s32.totalorder %s9, 3
    %p38 = por %p36, %p37
    %p39 = scmp.ne.s32.totalorder %s31, %s34
    %p40 = scmp.eq.s32.totalorder %s9, 0
    %p41 = por %p39, %p40
    %p42 = scmp.ne.s32.totalorder %s31, %s34
    %p43 = scmp.eq.s32.totalorder %s14, 3
    %p44 = por %p42, %p43
    %p45 = scmp.ne.s32.totalorder %s34, %s35
    %p46 = scmp.eq.s32.totalorder %s14, 0
    %p47 = por %p45, %p46
    %p48 = scmp.ne.s32.totalorder %s34, %s35
    %p49 = scmp.eq.s32.totalorder %s15, 3
    %p50 = por %p48, %p49
    %p52 = scmp.ne.s32.totalorder %s35, %s51
    %p53 = scmp.eq.s32.totalorder %s15, 0
    %p54 = por %p52, %p53
    %s56 = sadd.s32 %s55, 1
    %p59 = scmp.eq.s32.totalorder %s9, 3
    %p60 = scmp.ne.s32.totalorder %s55, %s57
    %p61 = scmp.eq.s32.totalorder %s9, 0
    %p62 = por %p60, %p61
    %p63 = scmp.ne.s32.totalorder %s55, %s57
    %p64 = scmp.eq.s32.totalorder %s14, 3
    %p65 = por %p63, %p64
    %p66 = scmp.ne.s32.totalorder %s57, %s58
    %p67 = scmp.eq.s32.totalorder %s14, 0
    %p68 = por %p66, %p67
    %p69 = scmp.ne.s32.totalorder %s57, %s58
    %p70 = scmp.eq.s32.totalorder %s15, 3
    %p71 = por %p69, %p70
    %p73 = scmp.ne.s32.totalorder %s58, %s72
    %p74 = scmp.eq.s32.totalorder %s15, 0
    %p75 = por %p73, %p74
    %s77 = sadd.s32 %s76, 1
    %p80 = scmp.eq.s32.totalorder %s9, 3
    %p81 = scmp.ne.s32.totalorder %s76, %s78
    %p82 = scmp.eq.s32.totalorder %s9, 0
    %p83 = por %p81, %p82
    %p84 = scmp.ne.s32.totalorder %s76, %s78
    %p85 = scmp.eq.s32.totalorder %s14, 3
    %p86 = por %p84, %p85
    %p87 = scmp.ne.s32.totalorder %s78, %s79
    %p88 = scmp.eq.s32.totalorder %s14, 0
    %p89 = por %p87, %p88
    %p90 = scmp.ne.s32.totalorder %s78, %s79
    %p91 = scmp.eq.s32.totalorder %s15, 3
    %p92 = por %p90, %p91
    %p94 = scmp.ne.s32.totalorder %s79, %s93
    %p95 = scmp.eq.s32.totalorder %s15, 0
    %p96 = por %p94, %p95
    %s97 = ssub.s32 %s16, %s28
    %s98 = ssub.s32 %s17, %s24
    %s99 = sor.u32 %s97, %s98
    %p100 = scmp.eq.s32.totalorder %s99, 0
    %s102 = sadd.s32 %s101, 1
    %s103 = scalar_select %p100, %s101, %s102
    %p106 = pneg %p100
    %p107 = scmp.eq.s32.totalorder %s9, 3
    %p108 = por %p106, %p107
    %p109 = scmp.ne.s32.totalorder %s101, %s104
    %p110 = scmp.eq.s32.totalorder %s9, 0
    %p111 = por %p109, %p110
    %p112 = scmp.ne.s32.totalorder %s101, %s104
    %p113 = scmp.eq.s32.totalorder %s14, 3
    %p114 = por %p112, %p113
    %p115 = scmp.ne.s32.totalorder %s104, %s105
    %p116 = scmp.eq.s32.totalorder %s14, 0
    %p117 = por %p115, %p116
    %p118 = scmp.ne.s32.totalorder %s104, %s105
    %p119 = scmp.eq.s32.totalorder %s15, 3
    %p120 = por %p118, %p119
    %p122 = scmp.ne.s32.totalorder %s105, %s121
    %p123 = scmp.eq.s32.totalorder %s15, 0
    %p124 = por %p122, %p123
    %p125 = scmp.le.s32.totalorder 1, %s9
    %p126 = scmp.lt.s32.totalorder %s9, 5
    %p127 = pnand %p125, %p126
    %p128 = pneg %p127
    // Predicated region
    $region9: #{vgg_block2_forward.1} parent=5 // pred_check
      _
    $region10: #{vgg_block2_forward.1} parent=5 // pred_check_branch
      %130 = sbr.rel (%p127) target = $region12
    $region11: #{vgg_block2_forward.1} parent=5 // pred_region
      %s131 = ssub.s32 %s9, 1
      // Predicated region
      $region13: #{vgg_block2_forward.1} parent=11 // pred_check
        %p132 = pneg %p68
      $region14: #{vgg_block2_forward.1} parent=11 // pred_check_branch
        %134 = sbr.rel (%p132) target = $region16
      $region15: #{vgg_block2_forward.1} parent=11 // pred_region
        _
      $region16: #{vgg_block2_forward.1} parent=11 // pred_fallthru
        _
      // Predicated region
      $region17: #{vgg_block2_forward.1} parent=11 // pred_check
        %p135 = pneg %p89
      $region18: #{vgg_block2_forward.1} parent=11 // pred_check_branch
        %137 = sbr.rel (%p135) target = $region20
      $region19: #{vgg_block2_forward.1} parent=11 // pred_region
        _
      $region20: #{vgg_block2_forward.1} parent=11 // pred_fallthru
        _
    $region12: #{vgg_block2_forward.1} parent=5 // pred_fallthru
      _
    %p138 = scmp.lt.s32.totalorder %s9, 4
    // Predicated region
    $region21: #{vgg_block2_forward.1} parent=5 // pred_check
      %p139 = pneg %p138
    $region22: #{vgg_block2_forward.1} parent=5 // pred_check_branch
      %141 = sbr.rel (%p139) target = $region24
    $region23: #{vgg_block2_forward.1} parent=5 // pred_region
      // Predicated region
      $region25: #{vgg_block2_forward.1} parent=23 // pred_check
        %p142 = pneg %p41
      $region26: #{vgg_block2_forward.1} parent=23 // pred_check_branch
        %144 = sbr.rel (%p142) target = $region28
      $region27: #{vgg_block2_forward.1} parent=23 // pred_region
        %p145 = scmp.lt.s32.totalorder %s16, 1
        %s146 = scalar_select %p145, %s16, 1
        %s147 = smul.addr %s146, 37
        %s148 = smul.addr %s147, 8
        %s149 = scalar_lea.vmem %s0, %s148
      $region28: #{vgg_block2_forward.1} parent=23 // pred_fallthru
        _
    $region24: #{vgg_block2_forward.1} parent=5 // pred_fallthru
      _
    %p150 = scmp.le.s32.totalorder 1, %s9
    %p151 = scmp.lt.s32.totalorder %s9, 5
    %p152 = pnand %p150, %p151
    %p153 = pneg %p152
    // Predicated region
    $region29: #{vgg_block2_forward.1} parent=5 // pred_check
      _
    $region30: #{vgg_block2_forward.1} parent=5 // pred_check_branch
      %155 = sbr.rel (%p152) target = $region32
    $region31: #{vgg_block2_forward.1} parent=5 // pred_region
      %s156 = ssub.s32 %s9, 1
      %p157 = scmp.lt.s32.totalorder %s18, 1
      %s158 = scalar_select %p157, %s18, 1
      %s159 = smul.addr %s158, 37
      %s160 = smul.addr %s159, 8
      %s161 = scalar_lea.vmem %s0, %s160
      %p162 = pneg %p47
      %p163 = pneg %p44
      %p164 = pneg %p68
      %p165 = pneg %p65
      %p166 = pneg %p89
      %p167 = pneg %p86
      %p168 = pneg %p117
      %p169 = pneg %p114
      %s170 = smul.u32 16, %s19
      %p171 = scmp.lt.s32.totalorder %s18, 1
      %s172 = scalar_select %p171, %s18, 1
      %p173 = scmp.lt.s32.totalorder %s170, 31
      %s174 = scalar_select %p173, %s170, 31
      %s175 = smul.addr %s172, 32
      %s176 = sadd.s32 %s174, %s175
      %s177 = smul.addr %s176, 4
      %s178 = scalar_lea.vmem %s3, %s177
      %p179 = scmp.lt.s32.totalorder %s18, 1
      %s180 = scalar_select %p179, %s18, 1
      %s181 = smul.addr %s180, 37
      %s182 = smul.addr %s181, 8
      %s183 = scalar_lea.vmem %s0, %s182
      %s184 = smul.u32 16, %s19
      %p185 = scmp.lt.s32.totalorder %s18, 1
      %s186 = scalar_select %p185, %s18, 1
      %p187 = scmp.lt.s32.totalorder %s184, 31
      %s188 = scalar_select %p187, %s184, 31
      %s189 = smul.addr %s186, 32
      %s190 = sadd.s32 %s188, %s189
      %s191 = smul.addr %s190, 4
      %s192 = scalar_lea.vmem %s3, %s191
      %s193 = smul.u32 16, %s19
      %s195 = smul.u32 %s19, 128
      %s196 = scalar_lea.vmem %s183, %s195
      %v197 = vld [vmem:[%s196] sm:$0xff]
      %v198 = vld [vmem:[%s196 + $0x8] sm:$0xff]
      %v199 = vld [vmem:[%s196 + $0x10] sm:$0xff]
      %v200 = vld [vmem:[%s196 + $0x18] sm:$0xff]
      %v201 = vld [vmem:[%s196 + $0x20] sm:$0xff]
      %v202 = vld [vmem:[%s196 + $0x28] sm:$0xff]
      %v203 = vld [vmem:[%s196 + $0x30] sm:$0xff]
      %v204 = vld [vmem:[%s196 + $0x38] sm:$0xff]
      %v205 = vld [vmem:[%s196 + $0x40] sm:$0xff]
      %v206 = vld [vmem:[%s196 + $0x48] sm:$0xff]
      %v207 = vld [vmem:[%s196 + $0x50] sm:$0xff]
      %v208 = vld [vmem:[%s196 + $0x58] sm:$0xff]
      %v209 = vld [vmem:[%s196 + $0x60] sm:$0xff]
      %v210 = vld [vmem:[%s196 + $0x68] sm:$0xff]
      %v211 = vld [vmem:[%s196 + $0x70] sm:$0xff]
      %v212 = vld [vmem:[%s196 + $0x78] sm:$0xff]
      %v213 = vld [vmem:[%s196 + $0x80] sm:$0xff]
      %v214 = vld [vmem:[%s196 + $0x88] sm:$0xff]
      %v215 = vld [vmem:[%s196 + $0x90] sm:$0xff]
      %v216 = vld [vmem:[%s196 + $0x98] sm:$0xff]
      %v217 = vld [vmem:[%s196 + $0xa0] sm:$0xff]
      %218 = vst [vmem:[#allocation2] sm:$0xff] 0.0
      %219 = vst [vmem:[#allocation2 + $0x8] sm:$0xff] 0.0
      %220 = vst [vmem:[#allocation2 + $0x10] sm:$0xff] 0.0
      %221 = vst [vmem:[#allocation2 + $0x18] sm:$0xff] 0.0
      %222 = vst [vmem:[#allocation2 + $0x20] sm:$0xff] 0.0
      %223 = vst [vmem:[#allocation2 + $0x28] sm:$0xff] 0.0
      %224 = vst [vmem:[#allocation2 + $0x30] sm:$0xff] 0.0
      %225 = vst [vmem:[#allocation2 + $0x38] sm:$0xff] 0.0
      %226 = vst [vmem:[#allocation2 + $0x40] sm:$0xff] 0.0
      %227 = vst [vmem:[#allocation2 + $0x48] sm:$0xff] 0.0
      %228 = vst [vmem:[#allocation2 + $0x50] sm:$0xff] 0.0
      %229 = vst [vmem:[#allocation2 + $0x58] sm:$0xff] 0.0
      %230 = vst [vmem:[#allocation2 + $0x60] sm:$0xff] 0.0
      %231 = vst [vmem:[#allocation2 + $0x68] sm:$0xff] 0.0
      %232 = vst [vmem:[#allocation2 + $0x70] sm:$0xff] 0.0
      %233 = vst [vmem:[#allocation2 + $0x78] sm:$0xff] 0.0
      %v234 = vpack.c.bf16 %v198, %v197
      %v235 = vpack.c.bf16 %v200, %v199
      %v236 = vpack.c.bf16 %v202, %v201
      %v237 = vpack.c.bf16 %v204, %v203
      %v238 = vpack.c.bf16 %v206, %v205
      %v239 = vpack.c.bf16 %v208, %v207
      %v240 = vpack.c.bf16 %v210, %v209
      %v241 = vpack.c.bf16 %v212, %v211
      %v242 = vld [vmem:[#allocation2] sm:$0xff]
      %v243 = vld [vmem:[#allocation2 + $0x8] sm:$0xff]
      %v244 = vld [vmem:[#allocation2 + $0x10] sm:$0xff]
      %v245 = vld [vmem:[#allocation2 + $0x18] sm:$0xff]
      %v246 = vld [vmem:[#allocation2 + $0x20] sm:$0xff]
      %v247 = vld [vmem:[#allocation2 + $0x28] sm:$0xff]
      %v248 = vld [vmem:[#allocation2 + $0x30] sm:$0xff]
      %v249 = vld [vmem:[#allocation2 + $0x38] sm:$0xff]
      %v250 = vld [vmem:[#allocation2 + $0x40] sm:$0xff]
      %v251 = vld [vmem:[#allocation2 + $0x48] sm:$0xff]
      %v252 = vld [vmem:[#allocation2 + $0x50] sm:$0xff]
      %v253 = vld [vmem:[#allocation2 + $0x58] sm:$0xff]
      %v254 = vld [vmem:[#allocation2 + $0x60] sm:$0xff]
      %v255 = vld [vmem:[#allocation2 + $0x68] sm:$0xff]
      %v256 = vld [vmem:[#allocation2 + $0x70] sm:$0xff]
      %v257 = vld [vmem:[#allocation2 + $0x78] sm:$0xff]
      %v258 = vld [vmem:[%s1] sm:$0x3]
      %vm259 = vcmask 31744
      %v261 = vsel %vm259, %v234, 0
      %v264 = vsel %vm259, %v235, 0
      %v267 = vsel %vm259, %v236, 0
      %v270 = vsel %vm259, %v237, 0
      %v273 = vsel %vm259, %v238, 0
      %v276 = vsel %vm259, %v239, 0
      %v279 = vsel %vm259, %v240, 0
      %v282 = vsel %vm259, %v241, 0
      %vm284 = vcmask 1041408
      %v286 = vsel %vm284, %v258, 0
      %288 = vmatpush.bf16.msra.mxu0 0
      %289 = vmatpush.bf16.msra.mxu0 0
      %290 = vmatpush.bf16.msra.mxu0 0
      %291 = vmatpush.bf16.msra.mxu0 0
      %292 = vmatpush.bf16.msra.mxu0 0
      %293 = vmatpush.bf16.msra.mxu0 0
      %294 = vmatpush.bf16.msra.mxu0 0
      %295 = vmatpush.bf16.msra.mxu0 %v286
      %296 = vmatmul.bf16.gmra.mxu0 %v261
      %v297 = vpop.f32.mrf.mxu0
      %v298 = vadd.f32 0.0, %v297
      %v299 = vpop.f32.mrf.mxu0
      %v300 = vadd.f32 0.0, %v299
      %301 = vmatmul.bf16.gmra.mxu0 %v264
      %v302 = vpop.f32.mrf.mxu0
      %v303 = vadd.f32 0.0, %v302
      %v304 = vpop.f32.mrf.mxu0
      %v305 = vadd.f32 0.0, %v304
      %306 = vmatmul.bf16.gmra.mxu0 %v267
      %v307 = vpop.f32.mrf.mxu0
      %v308 = vadd.f32 0.0, %v307
      %v309 = vpop.f32.mrf.mxu0
      %v310 = vadd.f32 0.0, %v309
      %311 = vmatmul.bf16.gmra.mxu0 %v270
      %v312 = vpop.f32.mrf.mxu0
      %v313 = vadd.f32 0.0, %v312
      %v314 = vpop.f32.mrf.mxu0
      %v315 = vadd.f32 0.0, %v314
      %316 = vmatmul.bf16.gmra.mxu0 %v273
      %v317 = vpop.f32.mrf.mxu0
      %v318 = vadd.f32 0.0, %v317
      %v319 = vpop.f32.mrf.mxu0
      %v320 = vadd.f32 0.0, %v319
      %321 = vmatmul.bf16.gmra.mxu0 %v276
      %v322 = vpop.f32.mrf.mxu0
      %v323 = vadd.f32 0.0, %v322
      %v324 = vpop.f32.mrf.mxu0
      %v325 = vadd.f32 0.0, %v324
      %326 = vmatmul.bf16.gmra.mxu0 %v279
      %v327 = vpop.f32.mrf.mxu0
      %v328 = vadd.f32 0.0, %v327
      %v329 = vpop.f32.mrf.mxu0
      %v330 = vadd.f32 0.0, %v329
      %331 = vmatmul.bf16.gmra.mxu0 %v282
      %v332 = vpop.f32.mrf.mxu0
      %v333 = vadd.f32 0.0, %v332
      %v334 = vpop.f32.mrf.mxu0
      %v335 = vadd.f32 0.0, %v334
      %336 = vdwg.mxu0
      %v337 = vadd.f32 %v242, %v298
      %v338 = vadd.f32 %v243, %v300
      %v339 = vadd.f32 %v244, %v303
      %v340 = vadd.f32 %v245, %v305
      %v341 = vadd.f32 %v246, %v308
      %v342 = vadd.f32 %v247, %v310
      %v343 = vadd.f32 %v248, %v313
      %v344 = vadd.f32 %v249, %v315
      %v345 = vadd.f32 %v250, %v318
      %v346 = vadd.f32 %v251, %v320
      %v347 = vadd.f32 %v252, %v323
      %v348 = vadd.f32 %v253, %v325
      %v349 = vadd.f32 %v254, %v328
      %v350 = vadd.f32 %v255, %v330
      %v351 = vadd.f32 %v256, %v333
      %v352 = vadd.f32 %v257, %v335
      %353 = vst [vmem:[#allocation2] sm:$0xff] %v337
      %354 = vst [vmem:[#allocation2 + $0x8] sm:$0xff] %v338
      %355 = vst [vmem:[#allocation2 + $0x10] sm:$0xff] %v339
      %356 = vst [vmem:[#allocation2 + $0x18] sm:$0xff] %v340
      %357 = vst [vmem:[#allocation2 + $0x20] sm:$0xff] %v341
      %358 = vst [vmem:[#allocation2 + $0x28] sm:$0xff] %v342
      %359 = vst [vmem:[#allocation2 + $0x30] sm:$0xff] %v343
      %360 = vst [vmem:[#allocation2 + $0x38] sm:$0xff] %v344
      %361 = vst [vmem:[#allocation2 + $0x40] sm:$0xff] %v345
      %362 = vst [vmem:[#allocation2 + $0x48] sm:$0xff] %v346
      %363 = vst [vmem:[#allocation2 + $0x50] sm:$0xff] %v347
      %364 = vst [vmem:[#allocation2 + $0x58] sm:$0xff] %v348
      %365 = vst [vmem:[#allocation2 + $0x60] sm:$0xff] %v349
      %366 = vst [vmem:[#allocation2 + $0x68] sm:$0xff] %v350
      %367 = vst [vmem:[#allocation2 + $0x70] sm:$0xff] %v351
      %368 = vst [vmem:[#allocation2 + $0x78] sm:$0xff] %v352
      %v369 = vpack.c.bf16 %v213, %v213
      %v370 = vld [vmem:[#allocation2] sm:$0xff]
      %v371 = vld [vmem:[#allocation2 + $0x8] sm:$0xff]
      %v372 = vld [vmem:[#allocation2 + $0x10] sm:$0xff]
      %v373 = vld [vmem:[#allocation2 + $0x18] sm:$0xff]
      %v374 = vld [vmem:[#allocation2 + $0x20] sm:$0xff]
      %v375 = vld [vmem:[#allocation2 + $0x28] sm:$0xff]
      %v376 = vld [vmem:[#allocation2 + $0x30] sm:$0xff]
      %v377 = vld [vmem:[#allocation2 + $0x38] sm:$0xff]
      %v378 = vld [vmem:[#allocation2 + $0x40] sm:$0xff]
      %v379 = vld [vmem:[#allocation2 + $0x48] sm:$0xff]
      %v380 = vld [vmem:[#allocation2 + $0x50] sm:$0xff]
      %v381 = vld [vmem:[#allocation2 + $0x58] sm:$0xff]
      %v382 = vld [vmem:[#allocation2 + $0x60] sm:$0xff]
      %v383 = vld [vmem:[#allocation2 + $0x68] sm:$0xff]
      %v384 = vld [vmem:[#allocation2 + $0x70] sm:$0xff]
      %v385 = vld [vmem:[#allocation2 + $0x78] sm:$0xff]
      %s386 = scalar_lea.vmem %s1, 2
      %v387 = vld [vmem:[%s386] sm:$0x3]
      %vm388 = vsmask.f32 7424
      %v389 = vshrl.u32 %v234, 16
      %v391 = vshll.u32 %v234, 16
      %v393 = vrot.slane %v391, 1
      %v394 = vor.u32 %v389, %v393
      %v395 = vshll.u32 %v235, 16
      %v397 = vrot.slane %v395, 1
      %v398 = vsel %vm388, %v394, %v397
      %v399 = vshrl.u32 %v235, 16
      %v401 = vor.u32 %v399, %v397
      %v402 = vshll.u32 %v236, 16
      %v404 = vrot.slane %v402, 1
      %v405 = vsel %vm388, %v401, %v404
      %v406 = vshrl.u32 %v236, 16
      %v408 = vor.u32 %v406, %v404
      %v409 = vshll.u32 %v237, 16
      %v411 = vrot.slane %v409, 1
      %v412 = vsel %vm388, %v408, %v411
      %v413 = vshrl.u32 %v237, 16
      %v415 = vor.u32 %v413, %v411
      %v416 = vshll.u32 %v238, 16
      %v418 = vrot.slane %v416, 1
      %v419 = vsel %vm388, %v415, %v418
      %v420 = vshrl.u32 %v238, 16
      %v422 = vor.u32 %v420, %v418
      %v423 = vshll.u32 %v239, 16
      %v425 = vrot.slane %v423, 1
      %v426 = vsel %vm388, %v422, %v425
      %v427 = vshrl.u32 %v239, 16
      %v429 = vor.u32 %v427, %v425
      %v430 = vshll.u32 %v240, 16
      %v432 = vrot.slane %v430, 1
      %v433 = vsel %vm388, %v429, %v432
      %v434 = vshrl.u32 %v240, 16
      %v436 = vor.u32 %v434, %v432
      %v437 = vshll.u32 %v241, 16
      %v439 = vrot.slane %v437, 1
      %v440 = vsel %vm388, %v436, %v439
      %v441 = vshrl.u32 %v241, 16
      %v443 = vor.u32 %v441, %v439
      %v445 = vshll.u32 %v369, 16
      %v447 = vrot.slane %v445, 1
      %v448 = vsel %vm388, %v443, %v447
      %v450 = vsel %vm259, %v398, 0
      %v453 = vsel %vm259, %v405, 0
      %v456 = vsel %vm259, %v412, 0
      %v459 = vsel %vm259, %v419, 0
      %v462 = vsel %vm259, %v426, 0
      %v465 = vsel %vm259, %v433, 0
      %v468 = vsel %vm259, %v440, 0
      %v471 = vsel %vm259, %v448, 0
      %v474 = vsel %vm284, %v387, 0
      %476 = vmatpush.bf16.msra.mxu0 0
      %477 = vmatpush.bf16.msra.mxu0 0
      %478 = vmatpush.bf16.msra.mxu0 0
      %479 = vmatpush.bf16.msra.mxu0 0
      %480 = vmatpush.bf16.msra.mxu0 0
      %481 = vmatpush.bf16.msra.mxu0 0
      %482 = vmatpush.bf16.msra.mxu0 0
      %483 = vmatpush.bf16.msra.mxu0 %v474
      %484 = vmatmul.bf16.gmra.mxu0 %v450
      %v485 = vpop.f32.mrf.mxu0
      %v486 = vadd.f32 0.0, %v485
      %v487 = vpop.f32.mrf.mxu0
      %v488 = vadd.f32 0.0, %v487
      %489 = vmatmul.bf16.gmra.mxu0 %v453
      %v490 = vpop.f32.mrf.mxu0
      %v491 = vadd.f32 0.0, %v490
      %v492 = vpop.f32.mrf.mxu0
      %v493 = vadd.f32 0.0, %v492
      %494 = vmatmul.bf16.gmra.mxu0 %v456
      %v495 = vpop.f32.mrf.mxu0
      %v496 = vadd.f32 0.0, %v495
      %v497 = vpop.f32.mrf.mxu0
      %v498 = vadd.f32 0.0, %v497
      %499 = vmatmul.bf16.gmra.mxu0 %v459
      %v500 = vpop.f32.mrf.mxu0
      %v501 = vadd.f32 0.0, %v500
      %v502 = vpop.f32.mrf.mxu0
      %v503 = vadd.f32 0.0, %v502
      %504 = vmatmul.bf16.gmra.mxu0 %v462
      %v505 = vpop.f32.mrf.mxu0
      %v506 = vadd.f32 0.0, %v505
      %v507 = vpop.f32.mrf.mxu0
      %v508 = vadd.f32 0.0, %v507
      %509 = vmatmul.bf16.gmra.mxu0 %v465
      %v510 = vpop.f32.mrf.mxu0
      %v511 = vadd.f32 0.0, %v510
      %v512 = vpop.f32.mrf.mxu0
      %v513 = vadd.f32 0.0, %v512
      %514 = vmatmul.bf16.gmra.mxu0 %v468
      %v515 = vpop.f32.mrf.mxu0
      %v516 = vadd.f32 0.0, %v515
      %v517 = vpop.f32.mrf.mxu0
      %v518 = vadd.f32 0.0, %v517
      %519 = vmatmul.bf16.gmra.mxu0 %v471
      %v520 = vpop.f32.mrf.mxu0
      %v521 = vadd.f32 0.0, %v520
      %v522 = vpop.f32.mrf.mxu0
      %v523 = vadd.f32 0.0, %v522
      %524 = vdwg.mxu0
      %v525 = vadd.f32 %v370, %v486
      %v526 = vadd.f32 %v371, %v488
      %v527 = vadd.f32 %v372, %v491
      %v528 = vadd.f32 %v373, %v493
      %v529 = vadd.f32 %v374, %v496
      %v530 = vadd.f32 %v375, %v498
      %v531 = vadd.f32 %v376, %v501
      %v532 = vadd.f32 %v377, %v503
      %v533 = vadd.f32 %v378, %v506
      %v534 = vadd.f32 %v379, %v508
      %v535 = vadd.f32 %v380, %v511
      %v536 = vadd.f32 %v381, %v513
      %v537 = vadd.f32 %v382, %v516
      %v538 = vadd.f32 %v383, %v518
      %v539 = vadd.f32 %v384, %v521
      %v540 = vadd.f32 %v385, %v523
      %541 = vst [vmem:[#allocation2] sm:$0xff] %v525
      %542 = vst [vmem:[#allocation2 + $0x8] sm:$0xff] %v526
      %543 = vst [vmem:[#allocation2 + $0x10] sm:$0xff] %v527
      %544 = vst [vmem:[#allocation2 + $0x18] sm:$0xff] %v528
      %545 = vst [vmem:[#allocation2 + $0x20] sm:$0xff] %v529
      %546 = vst [vmem:[#allocation2 + $0x28] sm:$0xff] %v530
      %547 = vst [vmem:[#allocation2 + $0x30] sm:$0xff] %v531
      %548 = vst [vmem:[#allocation2 + $0x38] sm:$0xff] %v532
      %549 = vst [vmem:[#allocation2 + $0x40] sm:$0xff] %v533
      %550 = vst [vmem:[#allocation2 + $0x48] sm:$0xff] %v534
      %551 = vst [vmem:[#allocation2 + $0x50] sm:$0xff] %v535
      %552 = vst [vmem:[#allocation2 + $0x58] sm:$0xff] %v536
      %553 = vst [vmem:[#allocation2 + $0x60] sm:$0xff] %v537
      %554 = vst [vmem:[#allocation2 + $0x68] sm:$0xff] %v538
      %555 = vst [vmem:[#allocation2 + $0x70] sm:$0xff] %v539
      %556 = vst [vmem:[#allocation2 + $0x78] sm:$0xff] %v540
      %v557 = vld [vmem:[#allocation2] sm:$0xff]
      %v558 = vld [vmem:[#allocation2 + $0x8] sm:$0xff]
      %v559 = vld [vmem:[#allocation2 + $0x10] sm:$0xff]
      %v560 = vld [vmem:[#allocation2 + $0x18] sm:$0xff]
      %v561 = vld [vmem:[#allocation2 + $0x20] sm:$0xff]
      %v562 = vld [vmem:[#allocation2 + $0x28] sm:$0xff]
      %v563 = vld [vmem:[#allocation2 + $0x30] sm:$0xff]
      %v564 = vld [vmem:[#allocation2 + $0x38] sm:$0xff]
      %v565 = vld [vmem:[#allocation2 + $0x40] sm:$0xff]
      %v566 = vld [vmem:[#allocation2 + $0x48] sm:$0xff]
      %v567 = vld [vmem:[#allocation2 + $0x50] sm:$0xff]
      %v568 = vld [vmem:[#allocation2 + $0x58] sm:$0xff]
      %v569 = vld [vmem:[#allocation2 + $0x60] sm:$0xff]
      %v570 = vld [vmem:[#allocation2 + $0x68] sm:$0xff]
      %v571 = vld [vmem:[#allocation2 + $0x70] sm:$0xff]
      %v572 = vld [vmem:[#allocation2 + $0x78] sm:$0xff]
      %s573 = scalar_lea.vmem %s1, 4
      %v574 = vld [vmem:[%s573] sm:$0x3]
      %vm584 = vcmask 1046528
      %v585 = vrot.slane %v234, 1
      %v586 = vrot.slane %v235, 1
      %v587 = vsel %vm584, %v585, %v586
      %v588 = vrot.slane %v236, 1
      %v589 = vsel %vm584, %v586, %v588
      %v590 = vrot.slane %v237, 1
      %v591 = vsel %vm584, %v588, %v590
      %v592 = vrot.slane %v238, 1
      %v593 = vsel %vm584, %v590, %v592
      %v594 = vrot.slane %v239, 1
      %v595 = vsel %vm584, %v592, %v594
      %v596 = vrot.slane %v240, 1
      %v597 = vsel %vm584, %v594, %v596
      %v598 = vrot.slane %v241, 1
      %v599 = vsel %vm584, %v596, %v598
      %v600 = vrot.slane %v369, 1
      %v601 = vsel %vm584, %v598, %v600
      %v603 = vsel %vm259, %v587, 0
      %v606 = vsel %vm259, %v589, 0
      %v609 = vsel %vm259, %v591, 0
      %v612 = vsel %vm259, %v593, 0
      %v615 = vsel %vm259, %v595, 0
      %v618 = vsel %vm259, %v597, 0
      %v621 = vsel %vm259, %v599, 0
      %v624 = vsel %vm259, %v601, 0
      %v627 = vsel %vm284, %v574, 0
      %629 = vmatpush.bf16.msra.mxu0 0
      %630 = vmatpush.bf16.msra.mxu0 0
      %631 = vmatpush.bf16.msra.mxu0 0
      %632 = vmatpush.bf16.msra.mxu0 0
      %633 = vmatpush.bf16.msra.mxu0 0
      %634 = vmatpush.bf16.msra.mxu0 0
      %635 = vmatpush.bf16.msra.mxu0 0
      %636 = vmatpush.bf16.msra.mxu0 %v627
      %637 = vmatmul.bf16.gmra.mxu0 %v603
      %v638 = vpop.f32.mrf.mxu0
      %v639 = vadd.f32 0.0, %v638
      %v640 = vpop.f32.mrf.mxu0
      %v641 = vadd.f32 0.0, %v640
      %642 = vmatmul.bf16.gmra.mxu0 %v606
      %v643 = vpop.f32.mrf.mxu0
      %v644 = vadd.f32 0.0, %v643
      %v645 = vpop.f32.mrf.mxu0
      %v646 = vadd.f32 0.0, %v645
      %647 = vmatmul.bf16.gmra.mxu0 %v609
      %v648 = vpop.f32.mrf.mxu0
      %v649 = vadd.f32 0.0, %v648
      %v650 = vpop.f32.mrf.mxu0
      %v651 = vadd.f32 0.0, %v650
      %652 = vmatmul.bf16.gmra.mxu0 %v612
      %v653 = vpop.f32.mrf.mxu0
      %v654 = vadd.f32 0.0, %v653
      %v655 = vpop.f32.mrf.mxu0
      %v656 = vadd.f32 0.0, %v655
      %657 = vmatmul.bf16.gmra.mxu0 %v615
      %v658 = vpop.f32.mrf.mxu0
      %v659 = vadd.f32 0.0, %v658
      %v660 = vpop.f32.mrf.mxu0
      %v661 = vadd.f32 0.0, %v660
      %662 = vmatmul.bf16.gmra.mxu0 %v618
      %v663 = vpop.f32.mrf.mxu0
      %v664 = vadd.f32 0.0, %v663
      %v665 = vpop.f32.mrf.mxu0
      %v666 = vadd.f32 0.0, %v665
      %667 = vmatmul.bf16.gmra.mxu0 %v621
      %v668 = vpop.f32.mrf.mxu0
      %v669 = vadd.f32 0.0, %v668
      %v670 = vpop.f32.mrf.mxu0
      %v671 = vadd.f32 0.0, %v670
      %672 = vmatmul.bf16.gmra.mxu0 %v624
      %v673 = vpop.f32.mrf.mxu0
      %v674 = vadd.f32 0.0, %v673
      %v675 = vpop.f32.mrf.mxu0
      %v676 = vadd.f32 0.0, %v675
      %677 = vdwg.mxu0
      %v678 = vadd.f32 %v557, %v639
      %v679 = vadd.f32 %v558, %v641
      %v680 = vadd.f32 %v559, %v644
      %v681 = vadd.f32 %v560, %v646
      %v682 = vadd.f32 %v561, %v649
      %v683 = vadd.f32 %v562, %v651
      %v684 = vadd.f32 %v563, %v654
      %v685 = vadd.f32 %v564, %v656
      %v686 = vadd.f32 %v565, %v659
      %v687 = vadd.f32 %v566, %v661
      %v688 = vadd.f32 %v567, %v664
      %v689 = vadd.f32 %v568, %v666
      %v690 = vadd.f32 %v569, %v669
      %v691 = vadd.f32 %v570, %v671
      %v692 = vadd.f32 %v571, %v674
      %v693 = vadd.f32 %v572, %v676
      %694 = vst [vmem:[#allocation2] sm:$0xff] %v678
      %695 = vst [vmem:[#allocation2 + $0x8] sm:$0xff] %v679
      %696 = vst [vmem:[#allocation2 + $0x10] sm:$0xff] %v680
      %697 = vst [vmem:[#allocation2 + $0x18] sm:$0xff] %v681
      %698 = vst [vmem:[#allocation2 + $0x20] sm:$0xff] %v682
      %699 = vst [vmem:[#allocation2 + $0x28] sm:$0xff] %v683
      %700 = vst [vmem:[#allocation2 + $0x30] sm:$0xff] %v684
      %701 = vst [vmem:[#allocation2 + $0x38] sm:$0xff] %v685
      %702 = vst [vmem:[#allocation2 + $0x40] sm:$0xff] %v686
      %703 = vst [vmem:[#allocation2 + $0x48] sm:$0xff] %v687
      %704 = vst [vmem:[#allocation2 + $0x50] sm:$0xff] %v688
      %705 = vst [vmem:[#allocation2 + $0x58] sm:$0xff] %v689
      %706 = vst [vmem:[#allocation2 + $0x60] sm:$0xff] %v690
      %707 = vst [vmem:[#allocation2 + $0x68] sm:$0xff] %v691
      %708 = vst [vmem:[#allocation2 + $0x70] sm:$0xff] %v692
      %709 = vst [vmem:[#allocation2 + $0x78] sm:$0xff] %v693
      %v710 = vpack.c.bf16 %v214, %v213
      %v711 = vld [vmem:[#allocation2] sm:$0xff]
      %v712 = vld [vmem:[#allocation2 + $0x8] sm:$0xff]
      %v713 = vld [vmem:[#allocation2 + $0x10] sm:$0xff]
      %v714 = vld [vmem:[#allocation2 + $0x18] sm:$0xff]
      %v715 = vld [vmem:[#allocation2 + $0x20] sm:$0xff]
      %v716 = vld [vmem:[#allocation2 + $0x28] sm:$0xff]
      %v717 = vld [vmem:[#allocation2 + $0x30] sm:$0xff]
      %v718 = vld [vmem:[#allocation2 + $0x38] sm:$0xff]
      %v719 = vld [vmem:[#allocation2 + $0x40] sm:$0xff]
      %v720 = vld [vmem:[#allocation2 + $0x48] sm:$0xff]
      %v721 = vld [vmem:[#allocation2 + $0x50] sm:$0xff]
      %v722 = vld [vmem:[#allocation2 + $0x58] sm:$0xff]
      %v723 = vld [vmem:[#allocation2 + $0x60] sm:$0xff]
      %v724 = vld [vmem:[#allocation2 + $0x68] sm:$0xff]
      %v725 = vld [vmem:[#allocation2 + $0x70] sm:$0xff]
      %v726 = vld [vmem:[#allocation2 + $0x78] sm:$0xff]
      %s727 = scalar_lea.vmem %s1, 6
      %v728 = vld [vmem:[%s727] sm:$0x3]
      %v730 = vsel %vm259, %v710, 0
      %v733 = vsel %vm284, %v728, 0
      %735 = vmatpush.bf16.msra.mxu0 0
      %736 = vmatpush.bf16.msra.mxu0 0
      %737 = vmatpush.bf16.msra.mxu0 0
      %738 = vmatpush.bf16.msra.mxu0 0
      %739 = vmatpush.bf16.msra.mxu0 0
      %740 = vmatpush.bf16.msra.mxu0 0
      %741 = vmatpush.bf16.msra.mxu0 0
      %742 = vmatpush.bf16.msra.mxu0 %v733
      %743 = vmatmul.bf16.gmra.mxu0 %v264
      %v744 = vpop.f32.mrf.mxu0
      %v745 = vadd.f32 0.0, %v744
      %v746 = vpop.f32.mrf.mxu0
      %v747 = vadd.f32 0.0, %v746
      %748 = vmatmul.bf16.gmra.mxu0 %v267
      %v749 = vpop.f32.mrf.mxu0
      %v750 = vadd.f32 0.0, %v749
      %v751 = vpop.f32.mrf.mxu0
      %v752 = vadd.f32 0.0, %v751
      %753 = vmatmul.bf16.gmra.mxu0 %v270
      %v754 = vpop.f32.mrf.mxu0
      %v755 = vadd.f32 0.0, %v754
      %v756 = vpop.f32.mrf.mxu0
      %v757 = vadd.f32 0.0, %v756
      %758 = vmatmul.bf16.gmra.mxu0 %v273
      %v759 = vpop.f32.mrf.mxu0
      %v760 = vadd.f32 0.0, %v759
      %v761 = vpop.f32.mrf.mxu0
      %v762 = vadd.f32 0.0, %v761
      %763 = vmatmul.bf16.gmra.mxu0 %v276
      %v764 = vpop.f32.mrf.mxu0
      %v765 = vadd.f32 0.0, %v764
      %v766 = vpop.f32.mrf.mxu0
      %v767 = vadd.f32 0.0, %v766
      %768 = vmatmul.bf16.gmra.mxu0 %v279
      %v769 = vpop.f32.mrf.mxu0
      %v770 = vadd.f32 0.0, %v769
      %v771 = vpop.f32.mrf.mxu0
      %v772 = vadd.f32 0.0, %v771
      %773 = vmatmul.bf16.gmra.mxu0 %v282
      %v774 = vpop.f32.mrf.mxu0
      %v775 = vadd.f32 0.0, %v774
      %v776 = vpop.f32.mrf.mxu0
      %v777 = vadd.f32 0.0, %v776
      %778 = vmatmul.bf16.gmra.mxu0 %v730
      %v779 = vpop.f32.mrf.mxu0
      %v780 = vadd.f32 0.0, %v779
      %v781 = vpop.f32.mrf.mxu0
      %v782 = vadd.f32 0.0, %v781
      %783 = vdwg.mxu0
      %v784 = vadd.f32 %v711, %v745
      %v785 = vadd.f32 %v712, %v747
      %v786 = vadd.f32 %v713, %v750
      %v787 = vadd.f32 %v714, %v752
      %v788 = vadd.f32 %v715, %v755
      %v789 = vadd.f32 %v716, %v757
      %v790 = vadd.f32 %v717, %v760
      %v791 = vadd.f32 %v718, %v762
      %v792 = vadd.f32 %v719, %v765
      %v793 = vadd.f32 %v720, %v767
      %v794 = vadd.f32 %v721, %v770
      %v795 = vadd.f32 %v722, %v772
      %v796 = vadd.f32 %v723, %v775
      %v797 = vadd.f32 %v724, %v777
      %v798 = vadd.f32 %v725, %v780
      %v799 = vadd.f32 %v726, %v782
      %800 = vst [vmem:[#allocation2] sm:$0xff] %v784
      %801 = vst [vmem:[#allocation2 + $0x8] sm:$0xff] %v785
      %802 = vst [vmem:[#allocation2 + $0x10] sm:$0xff] %v786
      %803 = vst [vmem:[#allocation2 + $0x18] sm:$0xff] %v787
      %804 = vst [vmem:[#allocation2 + $0x20] sm:$0xff] %v788
      %805 = vst [vmem:[#allocation2 + $0x28] sm:$0xff] %v789
      %806 = vst [vmem:[#allocation2 + $0x30] sm:$0xff] %v790
      %807 = vst [vmem:[#allocation2 + $0x38] sm:$0xff] %v791
      %808 = vst [vmem:[#allocation2 + $0x40] sm:$0xff] %v792
      %809 = vst [vmem:[#allocation2 + $0x48] sm:$0xff] %v793
      %810 = vst [vmem:[#allocation2 + $0x50] sm:$0xff] %v794
      %811 = vst [vmem:[#allocation2 + $0x58] sm:$0xff] %v795
      %812 = vst [vmem:[#allocation2 + $0x60] sm:$0xff] %v796
      %813 = vst [vmem:[#allocation2 + $0x68] sm:$0xff] %v797
      %814 = vst [vmem:[#allocation2 + $0x70] sm:$0xff] %v798
      %815 = vst [vmem:[#allocation2 + $0x78] sm:$0xff] %v799
      %v816 = vpack.c.bf16 %v215, %v215
      %v817 = vld [vmem:[#allocation2] sm:$0xff]
      %v818 = vld [vmem:[#allocation2 + $0x8] sm:$0xff]
      %v819 = vld [vmem:[#allocation2 + $0x10] sm:$0xff]
      %v820 = vld [vmem:[#allocation2 + $0x18] sm:$0xff]
      %v821 = vld [vmem:[#allocation2 + $0x20] sm:$0xff]
      %v822 = vld [vmem:[#allocation2 + $0x28] sm:$0xff]
      %v823 = vld [vmem:[#allocation2 + $0x30] sm:$0xff]
      %v824 = vld [vmem:[#allocation2 + $0x38] sm:$0xff]
      %v825 = vld [vmem:[#allocation2 + $0x40] sm:$0xff]
      %v826 = vld [vmem:[#allocation2 + $0x48] sm:$0xff]
      %v827 = vld [vmem:[#allocation2 + $0x50] sm:$0xff]
      %v828 = vld [vmem:[#allocation2 + $0x58] sm:$0xff]
      %v829 = vld [vmem:[#allocation2 + $0x60] sm:$0xff]
      %v830 = vld [vmem:[#allocation2 + $0x68] sm:$0xff]
      %v831 = vld [vmem:[#allocation2 + $0x70] sm:$0xff]
      %v832 = vld [vmem:[#allocation2 + $0x78] sm:$0xff]
      %s833 = scalar_lea.vmem %s1, 8
      %v834 = vld [vmem:[%s833] sm:$0x3]
      %v835 = vshll.u32 %v710, 16
      %v837 = vrot.slane %v835, 1
      %v838 = vsel %vm388, %v443, %v837
      %v839 = vshrl.u32 %v710, 16
      %v841 = vor.u32 %v839, %v837
      %v843 = vshll.u32 %v816, 16
      %v845 = vrot.slane %v843, 1
      %v846 = vsel %vm388, %v841, %v845
      %v848 = vsel %vm259, %v838, 0
      %v851 = vsel %vm259, %v846, 0
      %v854 = vsel %vm284, %v834, 0
      %856 = vmatpush.bf16.msra.mxu0 0
      %857 = vmatpush.bf16.msra.mxu0 0
      %858 = vmatpush.bf16.msra.mxu0 0
      %859 = vmatpush.bf16.msra.mxu0 0
      %860 = vmatpush.bf16.msra.mxu0 0
      %861 = vmatpush.bf16.msra.mxu0 0
      %862 = vmatpush.bf16.msra.mxu0 0
      %863 = vmatpush.bf16.msra.mxu0 %v854
      %864 = vmatmul.bf16.gmra.mxu0 %v453
      %v865 = vpop.f32.mrf.mxu0
      %v866 = vadd.f32 0.0, %v865
      %v867 = vpop.f32.mrf.mxu0
      %v868 = vadd.f32 0.0, %v867
      %869 = vmatmul.bf16.gmra.mxu0 %v456
      %v870 = vpop.f32.mrf.mxu0
      %v871 = vadd.f32 0.0, %v870
      %v872 = vpop.f32.mrf.mxu0
      %v873 = vadd.f32 0.0, %v872
      %874 = vmatmul.bf16.gmra.mxu0 %v459
      %v875 = vpop.f32.mrf.mxu0
      %v876 = vadd.f32 0.0, %v875
      %v877 = vpop.f32.mrf.mxu0
      %v878 = vadd.f32 0.0, %v877
      %879 = vmatmul.bf16.gmra.mxu0 %v462
      %v880 = vpop.f32.mrf.mxu0
      %v881 = vadd.f32 0.0, %v880
      %v882 = vpop.f32.mrf.mxu0
      %v883 = vadd.f32 0.0, %v882
      %884 = vmatmul.bf16.gmra.mxu0 %v465
      %v885 = vpop.f32.mrf.mxu0
      %v886 = vadd.f32 0.0, %v885
      %v887 = vpop.f32.mrf.mxu0
      %v888 = vadd.f32 0.0, %v887
      %889 = vmatmul.bf16.gmra.mxu0 %v468
      %v890 = vpop.f32.mrf.mxu0
      %v891 = vadd.f32 0.0, %v890
      %v892 = vpop.f32.mrf.mxu0
      %v893 = vadd.f32 0.0, %v892
      %894 = vmatmul.bf16.gmra.mxu0 %v848
      %v895 = vpop.f32.mrf.mxu0
      %v896 = vadd.f32 0.0, %v895
      %v897 = vpop.f32.mrf.mxu0
      %v898 = vadd.f32 0.0, %v897
      %899 = vmatmul.bf16.gmra.mxu0 %v851
      %v900 = vpop.f32.mrf.mxu0
      %v901 = vadd.f32 0.0, %v900
      %v902 = vpop.f32.mrf.mxu0
      %v903 = vadd.f32 0.0, %v902
      %904 = vdwg.mxu0
      %v905 = vadd.f32 %v817, %v866
      %v906 = vadd.f32 %v818, %v868
      %v907 = vadd.f32 %v819, %v871
      %v908 = vadd.f32 %v820, %v873
      %v909 = vadd.f32 %v821, %v876
      %v910 = vadd.f32 %v822, %v878
      %v911 = vadd.f32 %v823, %v881
      %v912 = vadd.f32 %v824, %v883
      %v913 = vadd.f32 %v825, %v886
      %v914 = vadd.f32 %v826, %v888
      %v915 = vadd.f32 %v827, %v891
      %v916 = vadd.f32 %v828, %v893
      %v917 = vadd.f32 %v829, %v896
      %v918 = vadd.f32 %v830, %v898
      %v919 = vadd.f32 %v831, %v901
      %v920 = vadd.f32 %v832, %v903
      %921 = vst [vmem:[#allocation2] sm:$0xff] %v905
      %922 = vst [vmem:[#allocation2 + $0x8] sm:$0xff] %v906
      %923 = vst [vmem:[#allocation2 + $0x10] sm:$0xff] %v907
      %924 = vst [vmem:[#allocation2 + $0x18] sm:$0xff] %v908
      %925 = vst [vmem:[#allocation2 + $0x20] sm:$0xff] %v909
      %926 = vst [vmem:[#allocation2 + $0x28] sm:$0xff] %v910
      %927 = vst [vmem:[#allocation2 + $0x30] sm:$0xff] %v911
      %928 = vst [vmem:[#allocation2 + $0x38] sm:$0xff] %v912
      %929 = vst [vmem:[#allocation2 + $0x40] sm:$0xff] %v913
      %930 = vst [vmem:[#allocation2 + $0x48] sm:$0xff] %v914
      %931 = vst [vmem:[#allocation2 + $0x50] sm:$0xff] %v915
      %932 = vst [vmem:[#allocation2 + $0x58] sm:$0xff] %v916
      %933 = vst [vmem:[#allocation2 + $0x60] sm:$0xff] %v917
      %934 = vst [vmem:[#allocation2 + $0x68] sm:$0xff] %v918
      %935 = vst [vmem:[#allocation2 + $0x70] sm:$0xff] %v919
      %936 = vst [vmem:[#allocation2 + $0x78] sm:$0xff] %v920
      %v937 = vld [vmem:[#allocation2] sm:$0xff]
      %v938 = vld [vmem:[#allocation2 + $0x8] sm:$0xff]
      %v939 = vld [vmem:[#allocation2 + $0x10] sm:$0xff]
      %v940 = vld [vmem:[#allocation2 + $0x18] sm:$0xff]
      %v941 = vld [vmem:[#allocation2 + $0x20] sm:$0xff]
      %v942 = vld [vmem:[#allocation2 + $0x28] sm:$0xff]
      %v943 = vld [vmem:[#allocation2 + $0x30] sm:$0xff]
      %v944 = vld [vmem:[#allocation2 + $0x38] sm:$0xff]
      %v945 = vld [vmem:[#allocation2 + $0x40] sm:$0xff]
      %v946 = vld [vmem:[#allocation2 + $0x48] sm:$0xff]
      %v947 = vld [vmem:[#allocation2 + $0x50] sm:$0xff]
      %v948 = vld [vmem:[#allocation2 + $0x58] sm:$0xff]
      %v949 = vld [vmem:[#allocation2 + $0x60] sm:$0xff]
      %v950 = vld [vmem:[#allocation2 + $0x68] sm:$0xff]
      %v951 = vld [vmem:[#allocation2 + $0x70] sm:$0xff]
      %v952 = vld [vmem:[#allocation2 + $0x78] sm:$0xff]
      %s953 = scalar_lea.vmem %s1, 10
      %v954 = vld [vmem:[%s953] sm:$0x3]
      %v957 = vrot.slane %v710, 1
      %v958 = vsel %vm584, %v598, %v957
      %v959 = vrot.slane %v816, 1
      %v960 = vsel %vm584, %v957, %v959
      %v962 = vsel %vm259, %v958, 0
      %v965 = vsel %vm259, %v960, 0
      %v968 = vsel %vm284, %v954, 0
      %970 = vmatpush.bf16.msra.mxu0 0
      %971 = vmatpush.bf16.msra.mxu0 0
      %972 = vmatpush.bf16.msra.mxu0 0
      %973 = vmatpush.bf16.msra.mxu0 0
      %974 = vmatpush.bf16.msra.mxu0 0
      %975 = vmatpush.bf16.msra.mxu0 0
      %976 = vmatpush.bf16.msra.mxu0 0
      %977 = vmatpush.bf16.msra.mxu0 %v968
      %978 = vmatmul.bf16.gmra.mxu0 %v606
      %v979 = vpop.f32.mrf.mxu0
      %v980 = vadd.f32 0.0, %v979
      %v981 = vpop.f32.mrf.mxu0
      %v982 = vadd.f32 0.0, %v981
      %983 = vmatmul.bf16.gmra.mxu0 %v609
      %v984 = vpop.f32.mrf.mxu0
      %v985 = vadd.f32 0.0, %v984
      %v986 = vpop.f32.mrf.mxu0
      %v987 = vadd.f32 0.0, %v986
      %988 = vmatmul.bf16.gmra.mxu0 %v612
      %v989 = vpop.f32.mrf.mxu0
      %v990 = vadd.f32 0.0, %v989
      %v991 = vpop.f32.mrf.mxu0
      %v992 = vadd.f32 0.0, %v991
      %993 = vmatmul.bf16.gmra.mxu0 %v615
      %v994 = vpop.f32.mrf.mxu0
      %v995 = vadd.f32 0.0, %v994
      %v996 = vpop.f32.mrf.mxu0
      %v997 = vadd.f32 0.0, %v996
      %998 = vmatmul.bf16.gmra.mxu0 %v618
      %v999 = vpop.f32.mrf.mxu0
      %v1000 = vadd.f32 0.0, %v999
      %v1001 = vpop.f32.mrf.mxu0
      %v1002 = vadd.f32 0.0, %v1001
      %1003 = vmatmul.bf16.gmra.mxu0 %v621
      %v1004 = vpop.f32.mrf.mxu0
      %v1005 = vadd.f32 0.0, %v1004
      %v1006 = vpop.f32.mrf.mxu0
      %v1007 = vadd.f32 0.0, %v1006
      %1008 = vmatmul.bf16.gmra.mxu0 %v962
      %v1009 = vpop.f32.mrf.mxu0
      %v1010 = vadd.f32 0.0, %v1009
      %v1011 = vpop.f32.mrf.mxu0
      %v1012 = vadd.f32 0.0, %v1011
      %1013 = vmatmul.bf16.gmra.mxu0 %v965
      %v1014 = vpop.f32.mrf.mxu0
      %v1015 = vadd.f32 0.0, %v1014
      %v1016 = vpop.f32.mrf.mxu0
      %v1017 = vadd.f32 0.0, %v1016
      %1018 = vdwg.mxu0
      %v1019 = vadd.f32 %v937, %v980
      %v1020 = vadd.f32 %v938, %v982
      %v1021 = vadd.f32 %v939, %v985
      %v1022 = vadd.f32 %v940, %v987
      %v1023 = vadd.f32 %v941, %v990
      %v1024 = vadd.f32 %v942, %v992
      %v1025 = vadd.f32 %v943, %v995
      %v1026 = vadd.f32 %v944, %v997
      %v1027 = vadd.f32 %v945, %v1000
      %v1028 = vadd.f32 %v946, %v1002
      %v1029 = vadd.f32 %v947, %v1005
      %v1030 = vadd.f32 %v948, %v1007
      %v1031 = vadd.f32 %v949, %v1010
      %v1032 = vadd.f32 %v950, %v1012
      %v1033 = vadd.f32 %v951, %v1015
      %v1034 = vadd.f32 %v952, %v1017
      %1035 = vst [vmem:[#allocation2] sm:$0xff] %v1019
      %1036 = vst [vmem:[#allocation2 + $0x8] sm:$0xff] %v1020
      %1037 = vst [vmem:[#allocation2 + $0x10] sm:$0xff] %v1021
      %1038 = vst [vmem:[#allocation2 + $0x18] sm:$0xff] %v1022
      %1039 = vst [vmem:[#allocation2 + $0x20] sm:$0xff] %v1023
      %1040 = vst [vmem:[#allocation2 + $0x28] sm:$0xff] %v1024
      %1041 = vst [vmem:[#allocation2 + $0x30] sm:$0xff] %v1025
      %1042 = vst [vmem:[#allocation2 + $0x38] sm:$0xff] %v1026
      %1043 = vst [vmem:[#allocation2 + $0x40] sm:$0xff] %v1027
      %1044 = vst [vmem:[#allocation2 + $0x48] sm:$0xff] %v1028
      %1045 = vst [vmem:[#allocation2 + $0x50] sm:$0xff] %v1029
      %1046 = vst [vmem:[#allocation2 + $0x58] sm:$0xff] %v1030
      %1047 = vst [vmem:[#allocation2 + $0x60] sm:$0xff] %v1031
      %1048 = vst [vmem:[#allocation2 + $0x68] sm:$0xff] %v1032
      %1049 = vst [vmem:[#allocation2 + $0x70] sm:$0xff] %v1033
      %1050 = vst [vmem:[#allocation2 + $0x78] sm:$0xff] %v1034
      %v1051 = vpack.c.bf16 %v216, %v215
      %v1052 = vld [vmem:[#allocation2] sm:$0xff]
      %v1053 = vld [vmem:[#allocation2 + $0x8] sm:$0xff]
      %v1054 = vld [vmem:[#allocation2 + $0x10] sm:$0xff]
      %v1055 = vld [vmem:[#allocation2 + $0x18] sm:$0xff]
      %v1056 = vld [vmem:[#allocation2 + $0x20] sm:$0xff]
      %v1057 = vld [vmem:[#allocation2 + $0x28] sm:$0xff]
      %v1058 = vld [vmem:[#allocation2 + $0x30] sm:$0xff]
      %v1059 = vld [vmem:[#allocation2 + $0x38] sm:$0xff]
      %v1060 = vld [vmem:[#allocation2 + $0x40] sm:$0xff]
      %v1061 = vld [vmem:[#allocation2 + $0x48] sm:$0xff]
      %v1062 = vld [vmem:[#allocation2 + $0x50] sm:$0xff]
      %v1063 = vld [vmem:[#allocation2 + $0x58] sm:$0xff]
      %v1064 = vld [vmem:[#allocation2 + $0x60] sm:$0xff]
      %v1065 = vld [vmem:[#allocation2 + $0x68] sm:$0xff]
      %v1066 = vld [vmem:[#allocation2 + $0x70] sm:$0xff]
      %v1067 = vld [vmem:[#allocation2 + $0x78] sm:$0xff]
      %s1068 = scalar_lea.vmem %s1, 12
      %v1069 = vld [vmem:[%s1068] sm:$0x3]
      %v1071 = vsel %vm259, %v1051, 0
      %v1074 = vsel %vm284, %v1069, 0
      %1076 = vmatpush.bf16.msra.mxu0 0
      %1077 = vmatpush.bf16.msra.mxu0 0
      %1078 = vmatpush.bf16.msra.mxu0 0
      %1079 = vmatpush.bf16.msra.mxu0 0
      %1080 = vmatpush.bf16.msra.mxu0 0
      %1081 = vmatpush.bf16.msra.mxu0 0
      %1082 = vmatpush.bf16.msra.mxu0 0
      %1083 = vmatpush.bf16.msra.mxu0 %v1074
      %1084 = vmatmul.bf16.gmra.mxu0 %v267
      %v1085 = vpop.f32.mrf.mxu0
      %v1086 = vadd.f32 0.0, %v1085
      %v1087 = vpop.f32.mrf.mxu0
      %v1088 = vadd.f32 0.0, %v1087
      %1089 = vmatmul.bf16.gmra.mxu0 %v270
      %v1090 = vpop.f32.mrf.mxu0
      %v1091 = vadd.f32 0.0, %v1090
      %v1092 = vpop.f32.mrf.mxu0
      %v1093 = vadd.f32 0.0, %v1092
      %1094 = vmatmul.bf16.gmra.mxu0 %v273
      %v1095 = vpop.f32.mrf.mxu0
      %v1096 = vadd.f32 0.0, %v1095
      %v1097 = vpop.f32.mrf.mxu0
      %v1098 = vadd.f32 0.0, %v1097
      %1099 = vmatmul.bf16.gmra.mxu0 %v276
      %v1100 = vpop.f32.mrf.mxu0
      %v1101 = vadd.f32 0.0, %v1100
      %v1102 = vpop.f32.mrf.mxu0
      %v1103 = vadd.f32 0.0, %v1102
      %1104 = vmatmul.bf16.gmra.mxu0 %v279
      %v1105 = vpop.f32.mrf.mxu0
      %v1106 = vadd.f32 0.0, %v1105
      %v1107 = vpop.f32.mrf.mxu0
      %v1108 = vadd.f32 0.0, %v1107
      %1109 = vmatmul.bf16.gmra.mxu0 %v282
      %v1110 = vpop.f32.mrf.mxu0
      %v1111 = vadd.f32 0.0, %v1110
      %v1112 = vpop.f32.mrf.mxu0
      %v1113 = vadd.f32 0.0, %v1112
      %1114 = vmatmul.bf16.gmra.mxu0 %v730
      %v1115 = vpop.f32.mrf.mxu0
      %v1116 = vadd.f32 0.0, %v1115
      %v1117 = vpop.f32.mrf.mxu0
      %v1118 = vadd.f32 0.0, %v1117
      %1119 = vmatmul.bf16.gmra.mxu0 %v1071
      %v1120 = vpop.f32.mrf.mxu0
      %v1121 = vadd.f32 0.0, %v1120
      %v1122 = vpop.f32.mrf.mxu0
      %v1123 = vadd.f32 0.0, %v1122
      %1124 = vdwg.mxu0
      %v1125 = vadd.f32 %v1052, %v1086
      %v1126 = vadd.f32 %v1053, %v1088
      %v1127 = vadd.f32 %v1054, %v1091
      %v1128 = vadd.f32 %v1055, %v1093
      %v1129 = vadd.f32 %v1056, %v1096
      %v1130 = vadd.f32 %v1057, %v1098
      %v1131 = vadd.f32 %v1058, %v1101
      %v1132 = vadd.f32 %v1059, %v1103
      %v1133 = vadd.f32 %v1060, %v1106
      %v1134 = vadd.f32 %v1061, %v1108
      %v1135 = vadd.f32 %v1062, %v1111
      %v1136 = vadd.f32 %v1063, %v1113
      %v1137 = vadd.f32 %v1064, %v1116
      %v1138 = vadd.f32 %v1065, %v1118
      %v1139 = vadd.f32 %v1066, %v1121
      %v1140 = vadd.f32 %v1067, %v1123
      %1141 = vst [vmem:[#allocation2] sm:$0xff] %v1125
      %1142 = vst [vmem:[#allocation2 + $0x8] sm:$0xff] %v1126
      %1143 = vst [vmem:[#allocation2 + $0x10] sm:$0xff] %v1127
      %1144 = vst [vmem:[#allocation2 + $0x18] sm:$0xff] %v1128
      %1145 = vst [vmem:[#allocation2 + $0x20] sm:$0xff] %v1129
      %1146 = vst [vmem:[#allocation2 + $0x28] sm:$0xff] %v1130
      %1147 = vst [vmem:[#allocation2 + $0x30] sm:$0xff] %v1131
      %1148 = vst [vmem:[#allocation2 + $0x38] sm:$0xff] %v1132
      %1149 = vst [vmem:[#allocation2 + $0x40] sm:$0xff] %v1133
      %1150 = vst [vmem:[#allocation2 + $0x48] sm:$0xff] %v1134
      %1151 = vst [vmem:[#allocation2 + $0x50] sm:$0xff] %v1135
      %1152 = vst [vmem:[#allocation2 + $0x58] sm:$0xff] %v1136
      %1153 = vst [vmem:[#allocation2 + $0x60] sm:$0xff] %v1137
      %1154 = vst [vmem:[#allocation2 + $0x68] sm:$0xff] %v1138
      %1155 = vst [vmem:[#allocation2 + $0x70] sm:$0xff] %v1139
      %1156 = vst [vmem:[#allocation2 + $0x78] sm:$0xff] %v1140
      %v1157 = vpack.c.bf16 %v217, %v217
      %v1158 = vld [vmem:[#allocation2] sm:$0xff]
      %v1159 = vld [vmem:[#allocation2 + $0x8] sm:$0xff]
      %v1160 = vld [vmem:[#allocation2 + $0x10] sm:$0xff]
      %v1161 = vld [vmem:[#allocation2 + $0x18] sm:$0xff]
      %v1162 = vld [vmem:[#allocation2 + $0x20] sm:$0xff]
      %v1163 = vld [vmem:[#allocation2 + $0x28] sm:$0xff]
      %v1164 = vld [vmem:[#allocation2 + $0x30] sm:$0xff]
      %v1165 = vld [vmem:[#allocation2 + $0x38] sm:$0xff]
      %v1166 = vld [vmem:[#allocation2 + $0x40] sm:$0xff]
      %v1167 = vld [vmem:[#allocation2 + $0x48] sm:$0xff]
      %v1168 = vld [vmem:[#allocation2 + $0x50] sm:$0xff]
      %v1169 = vld [vmem:[#allocation2 + $0x58] sm:$0xff]
      %v1170 = vld [vmem:[#allocation2 + $0x60] sm:$0xff]
      %v1171 = vld [vmem:[#allocation2 + $0x68] sm:$0xff]
      %v1172 = vld [vmem:[#allocation2 + $0x70] sm:$0xff]
      %v1173 = vld [vmem:[#allocation2 + $0x78] sm:$0xff]
      %s1174 = scalar_lea.vmem %s1, 14
      %v1175 = vld [vmem:[%s1174] sm:$0x3]
      %v1176 = vshll.u32 %v1051, 16
      %v1178 = vrot.slane %v1176, 1
      %v1179 = vsel %vm388, %v841, %v1178
      %v1180 = vshrl.u32 %v1051, 16
      %v1182 = vor.u32 %v1180, %v1178
      %v1184 = vshll.u32 %v1157, 16
      %v1186 = vrot.slane %v1184, 1
      %v1187 = vsel %vm388, %v1182, %v1186
      %v1189 = vsel %vm259, %v1179, 0
      %v1192 = vsel %vm259, %v1187, 0
      %v1195 = vsel %vm284, %v1175, 0
      %1197 = vmatpush.bf16.msra.mxu0 0
      %1198 = vmatpush.bf16.msra.mxu0 0
      %1199 = vmatpush.bf16.msra.mxu0 0
      %1200 = vmatpush.bf16.msra.mxu0 0
      %1201 = vmatpush.bf16.msra.mxu0 0
      %1202 = vmatpush.bf16.msra.mxu0 0
      %1203 = vmatpush.bf16.msra.mxu0 0
      %1204 = vmatpush.bf16.msra.mxu0 %v1195
      %1205 = vmatmul.bf16.gmra.mxu0 %v456
      %v1206 = vpop.f32.mrf.mxu0
      %v1207 = vadd.f32 0.0, %v1206
      %v1208 = vpop.f32.mrf.mxu0
      %v1209 = vadd.f32 0.0, %v1208
      %1210 = vmatmul.bf16.gmra.mxu0 %v459
      %v1211 = vpop.f32.mrf.mxu0
      %v1212 = vadd.f32 0.0, %v1211
      %v1213 = vpop.f32.mrf.mxu0
      %v1214 = vadd.f32 0.0, %v1213
      %1215 = vmatmul.bf16.gmra.mxu0 %v462
      %v1216 = vpop.f32.mrf.mxu0
      %v1217 = vadd.f32 0.0, %v1216
      %v1218 = vpop.f32.mrf.mxu0
      %v1219 = vadd.f32 0.0, %v1218
      %1220 = vmatmul.bf16.gmra.mxu0 %v465
      %v1221 = vpop.f32.mrf.mxu0
      %v1222 = vadd.f32 0.0, %v1221
      %v1223 = vpop.f32.mrf.mxu0
      %v1224 = vadd.f32 0.0, %v1223
      %1225 = vmatmul.bf16.gmra.mxu0 %v468
      %v1226 = vpop.f32.mrf.mxu0
      %v1227 = vadd.f32 0.0, %v1226
      %v1228 = vpop.f32.mrf.mxu0
      %v1229 = vadd.f32 0.0, %v1228
      %1230 = vmatmul.bf16.gmra.mxu0 %v848
      %v1231 = vpop.f32.mrf.mxu0
      %v1232 = vadd.f32 0.0, %v1231
      %v1233 = vpop.f32.mrf.mxu0
      %v1234 = vadd.f32 0.0, %v1233
      %1235 = vmatmul.bf16.gmra.mxu0 %v1189
      %v1236 = vpop.f32.mrf.mxu0
      %v1237 = vadd.f32 0.0, %v1236
      %v1238 = vpop.f32.mrf.mxu0
      %v1239 = vadd.f32 0.0, %v1238
      %1240 = vmatmul.bf16.gmra.mxu0 %v1192
      %v1241 = vpop.f32.mrf.mxu0
      %v1242 = vadd.f32 0.0, %v1241
      %v1243 = vpop.f32.mrf.mxu0
      %v1244 = vadd.f32 0.0, %v1243
      %1245 = vdwg.mxu0
      %v1246 = vadd.f32 %v1158, %v1207
      %v1247 = vadd.f32 %v1159, %v1209
      %v1248 = vadd.f32 %v1160, %v1212
      %v1249 = vadd.f32 %v1161, %v1214
      %v1250 = vadd.f32 %v1162, %v1217
      %v1251 = vadd.f32 %v1163, %v1219
      %v1252 = vadd.f32 %v1164, %v1222
      %v1253 = vadd.f32 %v1165, %v1224
      %v1254 = vadd.f32 %v1166, %v1227
      %v1255 = vadd.f32 %v1167, %v1229
      %v1256 = vadd.f32 %v1168, %v1232
      %v1257 = vadd.f32 %v1169, %v1234
      %v1258 = vadd.f32 %v1170, %v1237
      %v1259 = vadd.f32 %v1171, %v1239
      %v1260 = vadd.f32 %v1172, %v1242
      %v1261 = vadd.f32 %v1173, %v1244
      %1262 = vst [vmem:[#allocation2] sm:$0xff] %v1246
      %1263 = vst [vmem:[#allocation2 + $0x8] sm:$0xff] %v1247
      %1264 = vst [vmem:[#allocation2 + $0x10] sm:$0xff] %v1248
      %1265 = vst [vmem:[#allocation2 + $0x18] sm:$0xff] %v1249
      %1266 = vst [vmem:[#allocation2 + $0x20] sm:$0xff] %v1250
      %1267 = vst [vmem:[#allocation2 + $0x28] sm:$0xff] %v1251
      %1268 = vst [vmem:[#allocation2 + $0x30] sm:$0xff] %v1252
      %1269 = vst [vmem:[#allocation2 + $0x38] sm:$0xff] %v1253
      %1270 = vst [vmem:[#allocation2 + $0x40] sm:$0xff] %v1254
      %1271 = vst [vmem:[#allocation2 + $0x48] sm:$0xff] %v1255
      %1272 = vst [vmem:[#allocation2 + $0x50] sm:$0xff] %v1256
      %1273 = vst [vmem:[#allocation2 + $0x58] sm:$0xff] %v1257
      %1274 = vst [vmem:[#allocation2 + $0x60] sm:$0xff] %v1258
      %1275 = vst [vmem:[#allocation2 + $0x68] sm:$0xff] %v1259
      %1276 = vst [vmem:[#allocation2 + $0x70] sm:$0xff] %v1260
      %1277 = vst [vmem:[#allocation2 + $0x78] sm:$0xff] %v1261
      %v1278 = vld [vmem:[#allocation2] sm:$0xff]
      %v1279 = vld [vmem:[#allocation2 + $0x8] sm:$0xff]
      %v1280 = vld [vmem:[#allocation2 + $0x10] sm:$0xff]
      %v1281 = vld [vmem:[#allocation2 + $0x18] sm:$0xff]
      %v1282 = vld [vmem:[#allocation2 + $0x20] sm:$0xff]
      %v1283 = vld [vmem:[#allocation2 + $0x28] sm:$0xff]
      %v1284 = vld [vmem:[#allocation2 + $0x30] sm:$0xff]
      %v1285 = vld [vmem:[#allocation2 + $0x38] sm:$0xff]
      %v1286 = vld [vmem:[#allocation2 + $0x40] sm:$0xff]
      %v1287 = vld [vmem:[#allocation2 + $0x48] sm:$0xff]
      %v1288 = vld [vmem:[#allocation2 + $0x50] sm:$0xff]
      %v1289 = vld [vmem:[#allocation2 + $0x58] sm:$0xff]
      %v1290 = vld [vmem:[#allocation2 + $0x60] sm:$0xff]
      %v1291 = vld [vmem:[#allocation2 + $0x68] sm:$0xff]
      %v1292 = vld [vmem:[#allocation2 + $0x70] sm:$0xff]
      %v1293 = vld [vmem:[#allocation2 + $0x78] sm:$0xff]
      %s1294 = scalar_lea.vmem %s1, 16
      %v1295 = vld [vmem:[%s1294] sm:$0x3]
      %v1298 = vrot.slane %v1051, 1
      %v1299 = vsel %vm584, %v957, %v1298
      %v1300 = vrot.slane %v1157, 1
      %v1301 = vsel %vm584, %v1298, %v1300
      %v1303 = vsel %vm259, %v1299, 0
      %v1306 = vsel %vm259, %v1301, 0
      %v1309 = vsel %vm284, %v1295, 0
      %1311 = vmatpush.bf16.msra.mxu0 0
      %1312 = vmatpush.bf16.msra.mxu0 0
      %1313 = vmatpush.bf16.msra.mxu0 0
      %1314 = vmatpush.bf16.msra.mxu0 0
      %1315 = vmatpush.bf16.msra.mxu0 0
      %1316 = vmatpush.bf16.msra.mxu0 0
      %1317 = vmatpush.bf16.msra.mxu0 0
      %1318 = vmatpush.bf16.msra.mxu0 %v1309
      %1319 = vmatmul.bf16.gmra.mxu0 %v609
      %v1320 = vpop.f32.mrf.mxu0
      %v1321 = vadd.f32 0.0, %v1320
      %v1322 = vpop.f32.mrf.mxu0
      %v1323 = vadd.f32 0.0, %v1322
      %1324 = vmatmul.bf16.gmra.mxu0 %v612
      %v1325 = vpop.f32.mrf.mxu0
      %v1326 = vadd.f32 0.0, %v1325
      %v1327 = vpop.f32.mrf.mxu0
      %v1328 = vadd.f32 0.0, %v1327
      %1329 = vmatmul.bf16.gmra.mxu0 %v615
      %v1330 = vpop.f32.mrf.mxu0
      %v1331 = vadd.f32 0.0, %v1330
      %v1332 = vpop.f32.mrf.mxu0
      %v1333 = vadd.f32 0.0, %v1332
      %1334 = vmatmul.bf16.gmra.mxu0 %v618
      %v1335 = vpop.f32.mrf.mxu0
      %v1336 = vadd.f32 0.0, %v1335
      %v1337 = vpop.f32.mrf.mxu0
      %v1338 = vadd.f32 0.0, %v1337
      %1339 = vmatmul.bf16.gmra.mxu0 %v621
      %v1340 = vpop.f32.mrf.mxu0
      %v1341 = vadd.f32 0.0, %v1340
      %v1342 = vpop.f32.mrf.mxu0
      %v1343 = vadd.f32 0.0, %v1342
      %1344 = vmatmul.bf16.gmra.mxu0 %v962
      %v1345 = vpop.f32.mrf.mxu0
      %v1346 = vadd.f32 0.0, %v1345
      %v1347 = vpop.f32.mrf.mxu0
      %v1348 = vadd.f32 0.0, %v1347
      %1349 = vmatmul.bf16.gmra.mxu0 %v1303
      %v1350 = vpop.f32.mrf.mxu0
      %v1351 = vadd.f32 0.0, %v1350
      %v1352 = vpop.f32.mrf.mxu0
      %v1353 = vadd.f32 0.0, %v1352
      %1354 = vmatmul.bf16.gmra.mxu0 %v1306
      %v1355 = vpop.f32.mrf.mxu0
      %v1356 = vadd.f32 0.0, %v1355
      %v1357 = vpop.f32.mrf.mxu0
      %v1358 = vadd.f32 0.0, %v1357
      %1359 = vdwg.mxu0
      %v1360 = vadd.f32 %v1278, %v1321
      %v1361 = vadd.f32 %v1279, %v1323
      %v1362 = vadd.f32 %v1280, %v1326
      %v1363 = vadd.f32 %v1281, %v1328
      %v1364 = vadd.f32 %v1282, %v1331
      %v1365 = vadd.f32 %v1283, %v1333
      %v1366 = vadd.f32 %v1284, %v1336
      %v1367 = vadd.f32 %v1285, %v1338
      %v1368 = vadd.f32 %v1286, %v1341
      %v1369 = vadd.f32 %v1287, %v1343
      %v1370 = vadd.f32 %v1288, %v1346
      %v1371 = vadd.f32 %v1289, %v1348
      %v1372 = vadd.f32 %v1290, %v1351
      %v1373 = vadd.f32 %v1291, %v1353
      %v1374 = vadd.f32 %v1292, %v1356
      %v1375 = vadd.f32 %v1293, %v1358
      %1376 = vst [vmem:[#allocation2] sm:$0xff] %v1360
      %1377 = vst [vmem:[#allocation2 + $0x8] sm:$0xff] %v1361
      %1378 = vst [vmem:[#allocation2 + $0x10] sm:$0xff] %v1362
      %1379 = vst [vmem:[#allocation2 + $0x18] sm:$0xff] %v1363
      %1380 = vst [vmem:[#allocation2 + $0x20] sm:$0xff] %v1364
      %1381 = vst [vmem:[#allocation2 + $0x28] sm:$0xff] %v1365
      %1382 = vst [vmem:[#allocation2 + $0x30] sm:$0xff] %v1366
      %1383 = vst [vmem:[#allocation2 + $0x38] sm:$0xff] %v1367
      %1384 = vst [vmem:[#allocation2 + $0x40] sm:$0xff] %v1368
      %1385 = vst [vmem:[#allocation2 + $0x48] sm:$0xff] %v1369
      %1386 = vst [vmem:[#allocation2 + $0x50] sm:$0xff] %v1370
      %1387 = vst [vmem:[#allocation2 + $0x58] sm:$0xff] %v1371
      %1388 = vst [vmem:[#allocation2 + $0x60] sm:$0xff] %v1372
      %1389 = vst [vmem:[#allocation2 + $0x68] sm:$0xff] %v1373
      %1390 = vst [vmem:[#allocation2 + $0x70] sm:$0xff] %v1374
      %1391 = vst [vmem:[#allocation2 + $0x78] sm:$0xff] %v1375
      %v1392 = vld [vmem:[#allocation2] sm:$0xff]
      %v1393 = vld [vmem:[#allocation2 + $0x8] sm:$0xff]
      %v1394 = vld [vmem:[#allocation2 + $0x10] sm:$0xff]
      %v1395 = vld [vmem:[#allocation2 + $0x18] sm:$0xff]
      %v1396 = vld [vmem:[#allocation2 + $0x20] sm:$0xff]
      %v1397 = vld [vmem:[#allocation2 + $0x28] sm:$0xff]
      %v1398 = vld [vmem:[#allocation2 + $0x30] sm:$0xff]
      %v1399 = vld [vmem:[#allocation2 + $0x38] sm:$0xff]
      %v1400 = vld [vmem:[#allocation2 + $0x40] sm:$0xff]
      %v1401 = vld [vmem:[#allocation2 + $0x48] sm:$0xff]
      %v1402 = vld [vmem:[#allocation2 + $0x50] sm:$0xff]
      %v1403 = vld [vmem:[#allocation2 + $0x58] sm:$0xff]
      %v1404 = vld [vmem:[#allocation2 + $0x60] sm:$0xff]
      %v1405 = vld [vmem:[#allocation2 + $0x68] sm:$0xff]
      %v1406 = vld [vmem:[#allocation2 + $0x70] sm:$0xff]
      %v1407 = vld [vmem:[#allocation2 + $0x78] sm:$0xff]
      %v1408 = vld [vmem:[%s2] sm:$0x1]
      %v1410 = vperm.slane %v1408, 0
      %v1412 = vadd.f32 %v1392, %v1410
      %v1413 = vadd.f32 %v1393, %v1410
      %v1414 = vadd.f32 %v1394, %v1410
      %v1415 = vadd.f32 %v1395, %v1410
      %v1416 = vadd.f32 %v1396, %v1410
      %v1417 = vadd.f32 %v1397, %v1410
      %v1418 = vadd.f32 %v1398, %v1410
      %v1419 = vadd.f32 %v1399, %v1410
      %v1420 = vadd.f32 %v1400, %v1410
      %v1421 = vadd.f32 %v1401, %v1410
      %v1422 = vadd.f32 %v1402, %v1410
      %v1423 = vadd.f32 %v1403, %v1410
      %v1424 = vadd.f32 %v1404, %v1410
      %v1425 = vadd.f32 %v1405, %v1410
      %v1426 = vadd.f32 %v1406, %v1410
      %v1427 = vadd.f32 %v1407, %v1410
      %v1428 = vmax.f32 %v1412, 0.0
      %v1429 = vmax.f32 %v1413, 0.0
      %v1430 = vmax.f32 %v1414, 0.0
      %v1431 = vmax.f32 %v1415, 0.0
      %v1432 = vmax.f32 %v1416, 0.0
      %v1433 = vmax.f32 %v1417, 0.0
      %v1434 = vmax.f32 %v1418, 0.0
      %v1435 = vmax.f32 %v1419, 0.0
      %v1436 = vmax.f32 %v1420, 0.0
      %v1437 = vmax.f32 %v1421, 0.0
      %v1438 = vmax.f32 %v1422, 0.0
      %v1439 = vmax.f32 %v1423, 0.0
      %v1440 = vmax.f32 %v1424, 0.0
      %v1441 = vmax.f32 %v1425, 0.0
      %v1442 = vmax.f32 %v1426, 0.0
      %v1443 = vmax.f32 %v1427, 0.0
      %v1444 = vmin.f32 %v1428, 6.0
      %v1445 = vmin.f32 %v1429, 6.0
      %v1446 = vmin.f32 %v1430, 6.0
      %v1447 = vmin.f32 %v1431, 6.0
      %v1448 = vmin.f32 %v1432, 6.0
      %v1449 = vmin.f32 %v1433, 6.0
      %v1450 = vmin.f32 %v1434, 6.0
      %v1451 = vmin.f32 %v1435, 6.0
      %v1452 = vmin.f32 %v1436, 6.0
      %v1453 = vmin.f32 %v1437, 6.0
      %v1454 = vmin.f32 %v1438, 6.0
      %v1455 = vmin.f32 %v1439, 6.0
      %v1456 = vmin.f32 %v1440, 6.0
      %v1457 = vmin.f32 %v1441, 6.0
      %v1458 = vmin.f32 %v1442, 6.0
      %v1459 = vmin.f32 %v1443, 6.0
      %v1460 = vmul.f32 %v1444, 2.5
      %v1461 = vmul.f32 %v1445, 2.5
      %v1462 = vmul.f32 %v1446, 2.5
      %v1463 = vmul.f32 %v1447, 2.5
      %v1464 = vmul.f32 %v1448, 2.5
      %v1465 = vmul.f32 %v1449, 2.5
      %v1466 = vmul.f32 %v1450, 2.5
      %v1467 = vmul.f32 %v1451, 2.5
      %v1468 = vmul.f32 %v1452, 2.5
      %v1469 = vmul.f32 %v1453, 2.5
      %v1470 = vmul.f32 %v1454, 2.5
      %v1471 = vmul.f32 %v1455, 2.5
      %v1472 = vmul.f32 %v1456, 2.5
      %v1473 = vmul.f32 %v1457, 2.5
      %v1474 = vmul.f32 %v1458, 2.5
      %v1475 = vmul.f32 %v1459, 2.5
      %v1476 = vround.ne.pseudo %v1460
      %v1477 = vround.ne.pseudo %v1461
      %v1478 = vround.ne.pseudo %v1462
      %v1479 = vround.ne.pseudo %v1463
      %v1480 = vround.ne.pseudo %v1464
      %v1481 = vround.ne.pseudo %v1465
      %v1482 = vround.ne.pseudo %v1466
      %v1483 = vround.ne.pseudo %v1467
      %v1484 = vround.ne.pseudo %v1468
      %v1485 = vround.ne.pseudo %v1469
      %v1486 = vround.ne.pseudo %v1470
      %v1487 = vround.ne.pseudo %v1471
      %v1488 = vround.ne.pseudo %v1472
      %v1489 = vround.ne.pseudo %v1473
      %v1490 = vround.ne.pseudo %v1474
      %v1491 = vround.ne.pseudo %v1475
      %v1492 = vmul.f32 %v1476, 0.4
      %v1493 = vmul.f32 %v1477, 0.4
      %v1494 = vmul.f32 %v1478, 0.4
      %v1495 = vmul.f32 %v1479, 0.4
      %v1496 = vmul.f32 %v1480, 0.4
      %v1497 = vmul.f32 %v1481, 0.4
      %v1498 = vmul.f32 %v1482, 0.4
      %v1499 = vmul.f32 %v1483, 0.4
      %v1500 = vmul.f32 %v1484, 0.4
      %v1501 = vmul.f32 %v1485, 0.4
      %v1502 = vmul.f32 %v1486, 0.4
      %v1503 = vmul.f32 %v1487, 0.4
      %v1504 = vmul.f32 %v1488, 0.4
      %v1505 = vmul.f32 %v1489, 0.4
      %v1506 = vmul.f32 %v1490, 0.4
      %v1507 = vmul.f32 %v1491, 0.4
      %v1508 = vpack.c.bf16 %v1492, %v1492
      %v1509 = vpack.c.bf16 %v1493, %v1493
      %v1510 = vpack.c.bf16 %v1494, %v1494
      %v1511 = vpack.c.bf16 %v1495, %v1495
      %v1512 = vpack.c.bf16 %v1496, %v1496
      %v1513 = vpack.c.bf16 %v1497, %v1497
      %v1514 = vpack.c.bf16 %v1498, %v1498
      %v1515 = vpack.c.bf16 %v1499, %v1499
      %v1516 = vpack.c.bf16 %v1500, %v1500
      %v1517 = vpack.c.bf16 %v1501, %v1501
      %v1518 = vpack.c.bf16 %v1502, %v1502
      %v1519 = vpack.c.bf16 %v1503, %v1503
      %v1520 = vpack.c.bf16 %v1504, %v1504
      %v1521 = vpack.c.bf16 %v1505, %v1505
      %v1522 = vpack.c.bf16 %v1506, %v1506
      %v1523 = vpack.c.bf16 %v1507, %v1507
      %1524 = vst [vmem:[%s192] sm:$0xf] %v1508
      %1525 = vst [vmem:[%s192 + $0x4] sm:$0xf] %v1509
      %1526 = vst [vmem:[%s192 + $0x8] sm:$0xf] %v1510
      %1527 = vst [vmem:[%s192 + $0xc] sm:$0xf] %v1511
      %1528 = vst [vmem:[%s192 + $0x10] sm:$0xf] %v1512
      %1529 = vst [vmem:[%s192 + $0x14] sm:$0xf] %v1513
      %1530 = vst [vmem:[%s192 + $0x18] sm:$0xf] %v1514
      %1531 = vst [vmem:[%s192 + $0x1c] sm:$0xf] %v1515
      %1532 = vst [vmem:[%s192 + $0x20] sm:$0xf] %v1516
      %1533 = vst [vmem:[%s192 + $0x24] sm:$0xf] %v1517
      %1534 = vst [vmem:[%s192 + $0x28] sm:$0xf] %v1518
      %1535 = vst [vmem:[%s192 + $0x2c] sm:$0xf] %v1519
      %1536 = vst [vmem:[%s192 + $0x30] sm:$0xf] %v1520
      %1537 = vst [vmem:[%s192 + $0x34] sm:$0xf] %v1521
      %1538 = vst [vmem:[%s192 + $0x38] sm:$0xf] %v1522
      %1539 = vst [vmem:[%s192 + $0x3c] sm:$0xf] %v1523
      %s1540 = smul.u32 16, %s19
      %p1541 = scmp.lt.s32.totalorder %s18, 1
      %s1542 = scalar_select %p1541, %s18, 1
      %p1543 = scmp.lt.s32.totalorder %s1540, 31
      %s1544 = scalar_select %p1543, %s1540, 31
      %s1545 = smul.addr %s1542, 32
      %s1546 = sadd.s32 %s1544, %s1545
      %s1547 = smul.addr %s1546, 4
      %s1548 = scalar_lea.vmem %s3, %s1547
      // Predicated region
      $region33: #{vgg_block2_forward.1} parent=31 // pred_check
        %p1549 = pneg %p114
      $region34: #{vgg_block2_forward.1} parent=31 // pred_check_branch
        %1551 = sbr.rel (%p1549) target = $region36
      $region35: #{vgg_block2_forward.1} parent=31 // pred_region
        %s1552 = smul.u32 16, %s19
      $region36: #{vgg_block2_forward.1} parent=31 // pred_fallthru
        _
    $region32: #{vgg_block2_forward.1} parent=5 // pred_fallthru
      _
    %p1553 = scmp.le.s32.totalorder 2, %s9
    // Predicated region
    $region37: #{vgg_block2_forward.1} parent=5 // pred_check
      %p1554 = pneg %p1553
    $region38: #{vgg_block2_forward.1} parent=5 // pred_check_branch
      %1556 = sbr.rel (%p1554) target = $region40
    $region39: #{vgg_block2_forward.1} parent=5 // pred_region
      %s1557 = ssub.s32 %s9, 2
      // Predicated region
      $region41: #{vgg_block2_forward.1} parent=39 // pred_check
        %p1558 = pneg %p120
      $region42: #{vgg_block2_forward.1} parent=39 // pred_check_branch
        %1560 = sbr.rel (%p1558) target = $region44
      $region43: #{vgg_block2_forward.1} parent=39 // pred_region
        %s1561 = smul.u32 16, %s21
        %p1562 = scmp.lt.s32.totalorder %s20, 1
        %s1563 = scalar_select %p1562, %s20, 1
        %p1564 = scmp.lt.s32.totalorder %s1561, 31
        %s1565 = scalar_select %p1564, %s1561, 31
        %s1566 = smul.addr %s1563, 32
        %s1567 = sadd.s32 %s1565, %s1566
        %s1568 = smul.addr %s1567, 4
        %s1569 = scalar_lea.vmem %s3, %s1568
      $region44: #{vgg_block2_forward.1} parent=39 // pred_fallthru
        _
    $region40: #{vgg_block2_forward.1} parent=5 // pred_fallthru
      _
  $region6: #{vgg_block2_forward.1} parent=0 // loop_footer
    %s13 = sadd.s32 1, %s9
  $region7: #{vgg_block2_forward.1} parent=0 // loop_footer_branch
    %8 = sbr.rel target = $region3
  $region8: #{vgg_block2_forward.1} parent=0 // loop_exit
    _

</llo_original>
